<compile_context>
chip_gen: v7x
topology: tpu7x:2x2x1
jax: 0.10.0
libtpu: 0.0.40
codegen_flags: <defaults>
</compile_context>

<pallas_src>
import functools

import jax
import jax.numpy as jnp
from jax.experimental import pallas as pl
from jax.experimental.pallas import tpu as pltpu


def _round_up(x, m):
    return ((x + m - 1) // m) * m


def _vae_kernel(
    x_ref, eps_ref,
    # encoder params (weights bf16, biases f32)
    ew1_ref, eb1_ref, ew2_ref, eb2_ref, wmuls_ref, bmuls_ref,
    # decoder params
    dw1_ref, db1_ref, dw2_ref, db2_ref, dw3_ref, db3_ref,
    # outputs
    recon_ref, muls_ref,
):
    f32 = jnp.float32
    x = x_ref[...]
    eps = eps_ref[...]
    latent = eps.shape[-1]

    # ---- Encoder ----
    h = jnp.maximum(
        jnp.dot(x, ew1_ref[...].astype(f32), preferred_element_type=f32)
        + eb1_ref[...], 0.0)
    h = jnp.maximum(
        jnp.dot(h, ew2_ref[...].astype(f32), preferred_element_type=f32)
        + eb2_ref[...], 0.0)

    # Fused mu / logsigma heads: one [128, 2*latent] matmul.
    muls = (jnp.dot(h, wmuls_ref[...].astype(f32), preferred_element_type=f32)
            + bmuls_ref[...])
    mu = muls[:, :latent]
    logsigma = muls[:, latent:]

    # ---- Reparameterization: z = eps * exp(logsigma) + mu ----
    z = eps * jnp.exp(logsigma) + mu

    # ---- Decoder ----
    d = jnp.maximum(
        jnp.dot(z, dw1_ref[...].astype(f32), preferred_element_type=f32)
        + db1_ref[...], 0.0)
    d = jnp.maximum(
        jnp.dot(d, dw2_ref[...].astype(f32), preferred_element_type=f32)
        + db2_ref[...], 0.0)
    logits = (jnp.dot(d, dw3_ref[...].astype(f32), preferred_element_type=f32)
              + db3_ref[...])

    recon_ref[...] = jax.nn.sigmoid(logits).astype(recon_ref.dtype)
    muls_ref[...] = muls.astype(muls_ref.dtype)


@functools.partial(jax.jit, static_argnames=("block_batch",))
def vae_forward(x, eps, params, *, block_batch=256):
    """x: [B, state_size] f32, eps: [B, latent_size] f32.

    Returns (reconstruction [B, state_size], mu [B, latent], logsigma [B, latent]).
    """
    B, state_size = x.shape
    latent_size = eps.shape[1]

    # Batch tile: multiple of 8 (f32 sublanes), capped by block_batch.
    TB = min(block_batch, _round_up(B, 8))
    TB = _round_up(TB, 8)
    B_pad = _round_up(B, TB)
    if B_pad != B:
        x = jnp.pad(x, ((0, B_pad - B), (0, 0)))
        eps = jnp.pad(eps, ((0, B_pad - B), (0, 0)))
    grid = (B_pad // TB,)

    weight_keys = ("ew1", "eb1", "ew2", "eb2", "wmuls", "bmuls",
                   "dw1", "db1", "dw2", "db2", "dw3", "db3")
    weight_args = tuple(params[k] for k in weight_keys)

    act_spec = lambda feat: pl.BlockSpec((TB, feat), lambda i: (i, 0))
    # Weights/biases: constant block index -> DMA'd once, resident in VMEM.
    resident_spec = lambda arr: pl.BlockSpec(arr.shape, lambda i: (0, 0))

    in_specs = (
        [act_spec(state_size), act_spec(latent_size)]
        + [resident_spec(w) for w in weight_args]
    )
    out_specs = (
        act_spec(state_size),        # reconstruction
        act_spec(2 * latent_size),   # packed [mu | logsigma] (lane-dense)
    )
    out_shapes = (
        jax.ShapeDtypeStruct((B_pad, state_size), jnp.float32),
        jax.ShapeDtypeStruct((B_pad, 2 * latent_size), jnp.float32),
    )

    flops_per_row = 2 * (
        state_size * 256 + 256 * 128 + 128 * (2 * latent_size)
        + latent_size * 128 + 128 * 256 + 256 * state_size
    )
    transc_per_row = latent_size + state_size  # exp(logsigma) + sigmoid
    bytes_accessed = (
        x.size * 4 + eps.size * 4
        + sum(int(w.size) * w.dtype.itemsize for w in weight_args)
        + B_pad * state_size * 4 + B_pad * 2 * latent_size * 4
    )
    cost = pl.CostEstimate(
        flops=B_pad * flops_per_row,
        transcendentals=B_pad * transc_per_row,
        bytes_accessed=bytes_accessed,
    )

    recon, muls = pl.pallas_call(
        _vae_kernel,
        grid=grid,
        out_shape=out_shapes,
        in_specs=in_specs,
        out_specs=out_specs,
        compiler_params=pltpu.CompilerParams(
            dimension_semantics=("parallel",)),
        cost_estimate=cost,
    )(x, eps, *weight_args)

    recon = recon[:B]
    mu = muls[:B, :latent_size]
    logsigma = muls[:B, latent_size:]
    return recon, mu, logsigma


def init_params(key, state_size, latent_size):
    """Deterministic init mimicking PyTorch nn.Linear (uniform +-1/sqrt(fan_in)).

    Weights are stored pre-transposed as [in_features, out_features] in bf16;
    biases stay f32. The mu / logsigma heads are fused along the output dim."""
    def linear(key, fan_in, fan_out):
        kw, kb = jax.random.split(key)
        bound = 1.0 / jnp.sqrt(fan_in)
        w = jax.random.uniform(kw, (fan_in, fan_out), jnp.float32, -bound, bound)
        b = jax.random.uniform(kb, (1, fan_out), jnp.float32, -bound, bound)
        return w.astype(jnp.bfloat16), b

    keys = jax.random.split(key, 7)
    ew1, eb1 = linear(keys[0], state_size, 256)
    ew2, eb2 = linear(keys[1], 256, 128)
    wmu, bmu = linear(keys[2], 128, latent_size)
    wls, bls = linear(keys[3], 128, latent_size)
    dw1, db1 = linear(keys[4], latent_size, 128)
    dw2, db2 = linear(keys[5], 128, 256)
    dw3, db3 = linear(keys[6], 256, state_size)
    return dict(
        ew1=ew1, eb1=eb1, ew2=ew2, eb2=eb2,
        wmuls=jnp.concatenate([wmu, wls], axis=1),   # [128, 2*latent] bf16
        bmuls=jnp.concatenate([bmu, bls], axis=1),   # [1, 2*latent]  f32
        dw1=dw1, db1=db1, dw2=dw2, db2=db2, dw3=dw3, db3=db3,
    )


def _reference(x, eps, p):
    """Pure-JAX reference (same bf16->f32 weight cast as the kernel)."""
    f32 = jnp.float32
    latent = eps.shape[1]
    h = jax.nn.relu(x @ p["ew1"].astype(f32) + p["eb1"])
    h = jax.nn.relu(h @ p["ew2"].astype(f32) + p["eb2"])
    muls = h @ p["wmuls"].astype(f32) + p["bmuls"]
    mu, ls = muls[:, :latent], muls[:, latent:]
    z = eps * jnp.exp(ls) + mu
    d = jax.nn.relu(z @ p["dw1"].astype(f32) + p["db1"])
    d = jax.nn.relu(d @ p["dw2"].astype(f32) + p["db2"])
    recon = jax.nn.sigmoid(d @ p["dw3"].astype(f32) + p["db3"])
    return recon, mu, ls


if __name__ == "__main__":
    key = jax.random.PRNGKey(0)
    k_params, k_x, k_eps = jax.random.split(key, 3)

    batch = 32
    state_size = 16
    latent_size = 8

    params = init_params(k_params, state_size, latent_size)
    x = jax.random.normal(k_x, (batch, state_size), jnp.float32)
    # torch.randn_like(sigma) equivalent (sampled outside the kernel).
    eps = jax.random.normal(k_eps, (batch, latent_size), jnp.float32)

    # Small batch tile so the demo actually exercises the batch grid (4 steps).
    recon, mu, logsigma = vae_forward(x, eps, params, block_batch=8)
    jax.block_until_ready((recon, mu, logsigma))

    r_ref, mu_ref, ls_ref = _reference(x, eps, params)
    assert recon.shape == (batch, state_size)
    assert mu.shape == (batch, latent_size)
    assert logsigma.shape == (batch, latent_size)
    assert jnp.allclose(recon, r_ref, atol=1e-5, rtol=1e-5)
    assert jnp.allclose(mu, mu_ref, atol=1e-5, rtol=1e-5)
    assert jnp.allclose(logsigma, ls_ref, atol=1e-5, rtol=1e-5)

    print("KERNEL_OK")
</pallas_src>

<mosaic_0001>
module attributes {stable_mosaic.version = 11 : i64} {
  func.func @_vae_kernel(%arg0: i32, %arg1: memref<8x16xf32, #tpu.memory_space<vmem>>, %arg2: memref<8x8xf32, #tpu.memory_space<vmem>>, %arg3: memref<16x256xbf16, #tpu.memory_space<vmem>>, %arg4: memref<1x256xf32, #tpu.memory_space<vmem>>, %arg5: memref<256x128xbf16, #tpu.memory_space<vmem>>, %arg6: memref<1x128xf32, #tpu.memory_space<vmem>>, %arg7: memref<128x16xbf16, #tpu.memory_space<vmem>>, %arg8: memref<1x16xf32, #tpu.memory_space<vmem>>, %arg9: memref<8x128xbf16, #tpu.memory_space<vmem>>, %arg10: memref<1x128xf32, #tpu.memory_space<vmem>>, %arg11: memref<128x256xbf16, #tpu.memory_space<vmem>>, %arg12: memref<1x256xf32, #tpu.memory_space<vmem>>, %arg13: memref<256x16xbf16, #tpu.memory_space<vmem>>, %arg14: memref<1x16xf32, #tpu.memory_space<vmem>>, %arg15: memref<8x16xf32, #tpu.memory_space<vmem>>, %arg16: memref<8x16xf32, #tpu.memory_space<vmem>>) attributes {dimension_semantics = [#tpu.dimension_semantics<parallel>], iteration_bounds = array<i64: 4>, scalar_prefetch = 0 : i64, scratch_operands = 0 : i64, tpu.core_type = #tpu.core_type<tc>, window_params = [{transform_indices = @transform_0, window_bounds = array<i64: 8, 16>}, {transform_indices = @transform_1, window_bounds = array<i64: 8, 8>}, {pipeline_mode = #tpu.pipeline_mode<synchronous>, transform_indices = @transform_2, window_bounds = array<i64: 16, 256>}, {pipeline_mode = #tpu.pipeline_mode<synchronous>, transform_indices = @transform_3, window_bounds = array<i64: 1, 256>}, {pipeline_mode = #tpu.pipeline_mode<synchronous>, transform_indices = @transform_4, window_bounds = array<i64: 256, 128>}, {pipeline_mode = #tpu.pipeline_mode<synchronous>, transform_indices = @transform_5, window_bounds = array<i64: 1, 128>}, {pipeline_mode = #tpu.pipeline_mode<synchronous>, transform_indices = @transform_6, window_bounds = array<i64: 128, 16>}, {pipeline_mode = #tpu.pipeline_mode<synchronous>, transform_indices = @transform_7, window_bounds = array<i64: 1, 16>}, {pipeline_mode = #tpu.pipeline_mode<synchronous>, transform_indices = @transform_8, window_bounds = array<i64: 8, 128>}, {pipeline_mode = #tpu.pipeline_mode<synchronous>, transform_indices = @transform_9, window_bounds = array<i64: 1, 128>}, {pipeline_mode = #tpu.pipeline_mode<synchronous>, transform_indices = @transform_10, window_bounds = array<i64: 128, 256>}, {pipeline_mode = #tpu.pipeline_mode<synchronous>, transform_indices = @transform_11, window_bounds = array<i64: 1, 256>}, {pipeline_mode = #tpu.pipeline_mode<synchronous>, transform_indices = @transform_12, window_bounds = array<i64: 256, 16>}, {pipeline_mode = #tpu.pipeline_mode<synchronous>, transform_indices = @transform_13, window_bounds = array<i64: 1, 16>}, {transform_indices = @transform_14, window_bounds = array<i64: 8, 16>}, {transform_indices = @transform_15, window_bounds = array<i64: 8, 16>}]} {
    %c0 = arith.constant 0 : index
    %c0_0 = arith.constant 0 : index
    %0 = vector.load %arg1[%c0, %c0_0] : memref<8x16xf32, #tpu.memory_space<vmem>>, vector<8x16xf32>
    %c0_1 = arith.constant 0 : index
    %c0_2 = arith.constant 0 : index
    %1 = vector.load %arg2[%c0_1, %c0_2] : memref<8x8xf32, #tpu.memory_space<vmem>>, vector<8x8xf32>
    %c0_3 = arith.constant 0 : index
    %c0_4 = arith.constant 0 : index
    %2 = vector.load %arg3[%c0_3, %c0_4] : memref<16x256xbf16, #tpu.memory_space<vmem>>, vector<16x256xbf16>
    %3 = arith.extf %2 : vector<16x256xbf16> to vector<16x256xf32>
    %cst = arith.constant dense<0.000000e+00> : vector<8x256xf32>
    %4 = tpu.matmul %0, %3, %cst {dimension_numbers = #tpu.dot_dimension_numbers<[1], [0], [0], [1], [0, 0, 1, 1], [], []>} : vector<8x16xf32>, vector<16x256xf32>, vector<8x256xf32> -> vector<8x256xf32>
    %c0_5 = arith.constant 0 : index
    %c0_6 = arith.constant 0 : index
    %5 = vector.load %arg4[%c0_5, %c0_6] : memref<1x256xf32, #tpu.memory_space<vmem>>, vector<1x256xf32>
    %6 = vector.broadcast %5 : vector<1x256xf32> to vector<8x256xf32>
    %7 = arith.addf %4, %6 : vector<8x256xf32>
    %cst_7 = arith.constant 0.000000e+00 : f32
    %8 = vector.broadcast %cst_7 : f32 to vector<8x256xf32>
    %9 = arith.maximumf %7, %8 : vector<8x256xf32>
    %c0_8 = arith.constant 0 : index
    %c0_9 = arith.constant 0 : index
    %10 = vector.load %arg5[%c0_8, %c0_9] : memref<256x128xbf16, #tpu.memory_space<vmem>>, vector<256x128xbf16>
    %11 = arith.extf %10 : vector<256x128xbf16> to vector<256x128xf32>
    %cst_10 = arith.constant dense<0.000000e+00> : vector<8x128xf32>
    %12 = tpu.matmul %9, %11, %cst_10 {dimension_numbers = #tpu.dot_dimension_numbers<[1], [0], [0], [1], [0, 0, 1, 1], [], []>} : vector<8x256xf32>, vector<256x128xf32>, vector<8x128xf32> -> vector<8x128xf32>
    %c0_11 = arith.constant 0 : index
    %c0_12 = arith.constant 0 : index
    %13 = vector.load %arg6[%c0_11, %c0_12] : memref<1x128xf32, #tpu.memory_space<vmem>>, vector<1x128xf32>
    %14 = vector.broadcast %13 : vector<1x128xf32> to vector<8x128xf32>
    %15 = arith.addf %12, %14 : vector<8x128xf32>
    %cst_13 = arith.constant 0.000000e+00 : f32
    %16 = vector.broadcast %cst_13 : f32 to vector<8x128xf32>
    %17 = arith.maximumf %15, %16 : vector<8x128xf32>
    %c0_14 = arith.constant 0 : index
    %c0_15 = arith.constant 0 : index
    %18 = vector.load %arg7[%c0_14, %c0_15] : memref<128x16xbf16, #tpu.memory_space<vmem>>, vector<128x16xbf16>
    %19 = arith.extf %18 : vector<128x16xbf16> to vector<128x16xf32>
    %cst_16 = arith.constant dense<0.000000e+00> : vector<8x16xf32>
    %20 = tpu.matmul %17, %19, %cst_16 {dimension_numbers = #tpu.dot_dimension_numbers<[1], [0], [0], [1], [0, 0, 1, 1], [], []>} : vector<8x128xf32>, vector<128x16xf32>, vector<8x16xf32> -> vector<8x16xf32>
    %c0_17 = arith.constant 0 : index
    %c0_18 = arith.constant 0 : index
    %21 = vector.load %arg8[%c0_17, %c0_18] : memref<1x16xf32, #tpu.memory_space<vmem>>, vector<1x16xf32>
    %22 = vector.broadcast %21 : vector<1x16xf32> to vector<8x16xf32>
    %23 = arith.addf %20, %22 : vector<8x16xf32>
    %24 = vector.extract_strided_slice %23 {offsets = [0, 0], sizes = [8, 8], strides = [1, 1]} : vector<8x16xf32> to vector<8x8xf32>
    %25 = vector.extract_strided_slice %23 {offsets = [0, 8], sizes = [8, 8], strides = [1, 1]} : vector<8x16xf32> to vector<8x8xf32>
    %26 = math.exp %25 : vector<8x8xf32>
    %27 = arith.mulf %1, %26 : vector<8x8xf32>
    %28 = arith.addf %27, %24 : vector<8x8xf32>
    %c0_19 = arith.constant 0 : index
    %c0_20 = arith.constant 0 : index
    %29 = vector.load %arg9[%c0_19, %c0_20] : memref<8x128xbf16, #tpu.memory_space<vmem>>, vector<8x128xbf16>
    %30 = arith.extf %29 : vector<8x128xbf16> to vector<8x128xf32>
    %cst_21 = arith.constant dense<0.000000e+00> : vector<8x128xf32>
    %31 = tpu.matmul %28, %30, %cst_21 {dimension_numbers = #tpu.dot_dimension_numbers<[1], [0], [0], [1], [0, 0, 1, 1], [], []>} : vector<8x8xf32>, vector<8x128xf32>, vector<8x128xf32> -> vector<8x128xf32>
    %c0_22 = arith.constant 0 : index
    %c0_23 = arith.constant 0 : index
    %32 = vector.load %arg10[%c0_22, %c0_23] : memref<1x128xf32, #tpu.memory_space<vmem>>, vector<1x128xf32>
    %33 = vector.broadcast %32 : vector<1x128xf32> to vector<8x128xf32>
    %34 = arith.addf %31, %33 : vector<8x128xf32>
    %cst_24 = arith.constant 0.000000e+00 : f32
    %35 = vector.broadcast %cst_24 : f32 to vector<8x128xf32>
    %36 = arith.maximumf %34, %35 : vector<8x128xf32>
    %c0_25 = arith.constant 0 : index
    %c0_26 = arith.constant 0 : index
    %37 = vector.load %arg11[%c0_25, %c0_26] : memref<128x256xbf16, #tpu.memory_space<vmem>>, vector<128x256xbf16>
    %38 = arith.extf %37 : vector<128x256xbf16> to vector<128x256xf32>
    %cst_27 = arith.constant dense<0.000000e+00> : vector<8x256xf32>
    %39 = tpu.matmul %36, %38, %cst_27 {dimension_numbers = #tpu.dot_dimension_numbers<[1], [0], [0], [1], [0, 0, 1, 1], [], []>} : vector<8x128xf32>, vector<128x256xf32>, vector<8x256xf32> -> vector<8x256xf32>
    %c0_28 = arith.constant 0 : index
    %c0_29 = arith.constant 0 : index
    %40 = vector.load %arg12[%c0_28, %c0_29] : memref<1x256xf32, #tpu.memory_space<vmem>>, vector<1x256xf32>
    %41 = vector.broadcast %40 : vector<1x256xf32> to vector<8x256xf32>
    %42 = arith.addf %39, %41 : vector<8x256xf32>
    %cst_30 = arith.constant 0.000000e+00 : f32
    %43 = vector.broadcast %cst_30 : f32 to vector<8x256xf32>
    %44 = arith.maximumf %42, %43 : vector<8x256xf32>
    %c0_31 = arith.constant 0 : index
    %c0_32 = arith.constant 0 : index
    %45 = vector.load %arg13[%c0_31, %c0_32] : memref<256x16xbf16, #tpu.memory_space<vmem>>, vector<256x16xbf16>
    %46 = arith.extf %45 : vector<256x16xbf16> to vector<256x16xf32>
    %cst_33 = arith.constant dense<0.000000e+00> : vector<8x16xf32>
    %47 = tpu.matmul %44, %46, %cst_33 {dimension_numbers = #tpu.dot_dimension_numbers<[1], [0], [0], [1], [0, 0, 1, 1], [], []>} : vector<8x256xf32>, vector<256x16xf32>, vector<8x16xf32> -> vector<8x16xf32>
    %c0_34 = arith.constant 0 : index
    %c0_35 = arith.constant 0 : index
    %48 = vector.load %arg14[%c0_34, %c0_35] : memref<1x16xf32, #tpu.memory_space<vmem>>, vector<1x16xf32>
    %49 = vector.broadcast %48 : vector<1x16xf32> to vector<8x16xf32>
    %50 = arith.addf %47, %49 : vector<8x16xf32>
    %51 = arith.negf %50 : vector<8x16xf32>
    %52 = math.exp %51 : vector<8x16xf32>
    %cst_36 = arith.constant 1.000000e+00 : f32
    %53 = vector.broadcast %cst_36 : f32 to vector<8x16xf32>
    %54 = arith.addf %53, %52 : vector<8x16xf32>
    %55 = arith.divf %53, %54 : vector<8x16xf32>
    %c0_37 = arith.constant 0 : index
    %c0_38 = arith.constant 0 : index
    %56 = vector.load %arg15[%c0_37, %c0_38] : memref<8x16xf32, #tpu.memory_space<vmem>>, vector<8x16xf32>
    tpu.vector_store %arg15[%c0_37, %c0_38], %55 {strides = array<i32>} : memref<8x16xf32, #tpu.memory_space<vmem>>, vector<8x16xf32>,
    %c0_39 = arith.constant 0 : index
    %c0_40 = arith.constant 0 : index
    %57 = vector.load %arg16[%c0_39, %c0_40] : memref<8x16xf32, #tpu.memory_space<vmem>>, vector<8x16xf32>
    tpu.vector_store %arg16[%c0_39, %c0_40], %23 {strides = array<i32>} : memref<8x16xf32, #tpu.memory_space<vmem>>, vector<8x16xf32>,
    return
  }
  func.func @transform_0(%arg0: i32) -> (i32, i32) {
    %c0_i32 = arith.constant 0 : i32
    %c0_i32_0 = arith.constant 0 : i32
    return %arg0, %c0_i32 : i32, i32
  }
  func.func @transform_1(%arg0: i32) -> (i32, i32) {
    %c0_i32 = arith.constant 0 : i32
    %c0_i32_0 = arith.constant 0 : i32
    return %arg0, %c0_i32 : i32, i32
  }
  func.func @transform_2(%arg0: i32) -> (i32, i32) {
    %c0_i32 = arith.constant 0 : i32
    %c0_i32_0 = arith.constant 0 : i32
    %c0_i32_1 = arith.constant 0 : i32
    return %c0_i32, %c0_i32_0 : i32, i32
  }
  func.func @transform_3(%arg0: i32) -> (i32, i32) {
    %c0_i32 = arith.constant 0 : i32
    %c0_i32_0 = arith.constant 0 : i32
    %c0_i32_1 = arith.constant 0 : i32
    return %c0_i32, %c0_i32_0 : i32, i32
  }
  func.func @transform_4(%arg0: i32) -> (i32, i32) {
    %c0_i32 = arith.constant 0 : i32
    %c0_i32_0 = arith.constant 0 : i32
    %c0_i32_1 = arith.constant 0 : i32
    return %c0_i32, %c0_i32_0 : i32, i32
  }
  func.func @transform_5(%arg0: i32) -> (i32, i32) {
    %c0_i32 = arith.constant 0 : i32
    %c0_i32_0 = arith.constant 0 : i32
    %c0_i32_1 = arith.constant 0 : i32
    return %c0_i32, %c0_i32_0 : i32, i32
  }
  func.func @transform_6(%arg0: i32) -> (i32, i32) {
    %c0_i32 = arith.constant 0 : i32
    %c0_i32_0 = arith.constant 0 : i32
    %c0_i32_1 = arith.constant 0 : i32
    return %c0_i32, %c0_i32_0 : i32, i32
  }
  func.func @transform_7(%arg0: i32) -> (i32, i32) {
    %c0_i32 = arith.constant 0 : i32
    %c0_i32_0 = arith.constant 0 : i32
    %c0_i32_1 = arith.constant 0 : i32
    return %c0_i32, %c0_i32_0 : i32, i32
  }
  func.func @transform_8(%arg0: i32) -> (i32, i32) {
    %c0_i32 = arith.constant 0 : i32
    %c0_i32_0 = arith.constant 0 : i32
    %c0_i32_1 = arith.constant 0 : i32
    return %c0_i32, %c0_i32_0 : i32, i32
  }
  func.func @transform_9(%arg0: i32) -> (i32, i32) {
    %c0_i32 = arith.constant 0 : i32
    %c0_i32_0 = arith.constant 0 : i32
    %c0_i32_1 = arith.constant 0 : i32
    return %c0_i32, %c0_i32_0 : i32, i32
  }
  func.func @transform_10(%arg0: i32) -> (i32, i32) {
    %c0_i32 = arith.constant 0 : i32
    %c0_i32_0 = arith.constant 0 : i32
    %c0_i32_1 = arith.constant 0 : i32
    return %c0_i32, %c0_i32_0 : i32, i32
  }
  func.func @transform_11(%arg0: i32) -> (i32, i32) {
    %c0_i32 = arith.constant 0 : i32
    %c0_i32_0 = arith.constant 0 : i32
    %c0_i32_1 = arith.constant 0 : i32
    return %c0_i32, %c0_i32_0 : i32, i32
  }
  func.func @transform_12(%arg0: i32) -> (i32, i32) {
    %c0_i32 = arith.constant 0 : i32
    %c0_i32_0 = arith.constant 0 : i32
    %c0_i32_1 = arith.constant 0 : i32
    return %c0_i32, %c0_i32_0 : i32, i32
  }
  func.func @transform_13(%arg0: i32) -> (i32, i32) {
    %c0_i32 = arith.constant 0 : i32
    %c0_i32_0 = arith.constant 0 : i32
    %c0_i32_1 = arith.constant 0 : i32
    return %c0_i32, %c0_i32_0 : i32, i32
  }
  func.func @transform_14(%arg0: i32) -> (i32, i32) {
    %c0_i32 = arith.constant 0 : i32
    %c0_i32_0 = arith.constant 0 : i32
    return %arg0, %c0_i32 : i32, i32
  }
  func.func @transform_15(%arg0: i32) -> (i32, i32) {
    %c0_i32 = arith.constant 0 : i32
    %c0_i32_0 = arith.constant 0 : i32
    return %arg0, %c0_i32 : i32, i32
  }
}

</mosaic_0001>

<llo_original>
// kernel: vae_forward.1
$region0: #{vae_forward.1}
  #allocation0 [shape = 'u32[]', space=smem, size = 0x4, offset = 0x4, fixed_abs, tag = 'smem constant byte address 0x4 - core index']
  #allocation1 [shape = 'u32[144,128]{1,0:T(1,128)}', space=vmem, size = 0x12000, scoped, tag = 'internal scratch']
  %s0 = inlined_call_operand.vmem [shape: f32[32,16], index: 0, kind: input, shape index: {}]
  %s1 = inlined_call_operand.vmem [shape: f32[32,8], index: 1, kind: input, shape index: {}]
  %s2 = inlined_call_operand.vmem [shape: bf16[16,256], index: 2, kind: input, shape index: {}]
  %s3 = inlined_call_operand.vmem [shape: f32[1,256], index: 3, kind: input, shape index: {}]
  %s4 = inlined_call_operand.vmem [shape: bf16[256,128], index: 4, kind: input, shape index: {}]
  %s5 = inlined_call_operand.vmem [shape: f32[1,128], index: 5, kind: input, shape index: {}]
  %s6 = inlined_call_operand.vmem [shape: bf16[128,16], index: 6, kind: input, shape index: {}]
  %s7 = inlined_call_operand.hbm [shape: f32[1,16], index: 7, kind: input, shape index: {}]
  %s8 = inlined_call_operand.vmem [shape: bf16[8,128], index: 8, kind: input, shape index: {}]
  %s9 = inlined_call_operand.vmem [shape: f32[1,128], index: 9, kind: input, shape index: {}]
  %s10 = inlined_call_operand.vmem [shape: bf16[128,256], index: 10, kind: input, shape index: {}]
  %s11 = inlined_call_operand.vmem [shape: f32[1,256], index: 11, kind: input, shape index: {}]
  %s12 = inlined_call_operand.vmem [shape: bf16[256,16], index: 12, kind: input, shape index: {}]
  %s13 = inlined_call_operand.vmem [shape: f32[1,16], index: 13, kind: input, shape index: {}]
  %s14 = inlined_call_operand.vmem [shape: f32[32,16], index: 14, kind: output, shape index: {0}]
  %s15 = inlined_call_operand.vmem [shape: f32[32,16], index: 15, kind: output, shape index: {1}]
  %16 = xla_tuple %s14, %s15
  %s17 = sld [smem:[#allocation0]]
  $region101: #{vae_forward.1} parent=0
    _
  %s19 = ssub.s32 1, %s17
  %s20 = scalar_select 0, %s19, %s17
  $region1: #{vae_forward.1} parent=0
    #allocation2 [shape = 'u8[512]{0}', space=vmem, size = 0x400, scoped, tag = 'input window, operand 7, single buffered']
    #allocation3 [shape = 's32[2]{0}', space=sflag, size = 0x8, scoped, tag = 'scoped memory for vae_forward.1']
    %21 = vsyncpa [#allocation3], 0
    loop: start=0, step=1, limit=6
    $region2: #{vae_forward.1} parent=1 // loop_pre_header
      _
    $region3: #{vae_forward.1} parent=1 // loop_header
      %s23 = sphi 0, %s27
      %p24 = scmp.ge.s32.totalorder %s23, 6
      %s33 = sphi 0, %s35
      %s36 = sphi 0, %s33
      %s37 = sphi 0, %s36
      %s53 = sphi 0, %s37
      %s59 = sphi 0, %s61
      %s62 = sphi 0, %s59
      %s63 = sphi 0, %s62
      %s79 = sphi 0, %s63
      %s83 = sphi 0, %s83
      %s85 = sphi 0, %s83
      %s86 = sphi 0, %s85
      %s100 = sphi 0, %s86
      %s104 = sphi 0, %s104
      %s106 = sphi 0, %s104
      %s107 = sphi 0, %s106
      %s121 = sphi 0, %s107
      %s125 = sphi 0, %s125
      %s127 = sphi 0, %s125
      %s128 = sphi 0, %s127
      %s142 = sphi 0, %s128
      %s146 = sphi 0, %s146
      %s148 = sphi 0, %s146
      %s149 = sphi 0, %s148
      %s163 = sphi 0, %s149
      %s167 = sphi 0, %s167
      %s169 = sphi 0, %s167
      %s170 = sphi 0, %s169
      %s184 = sphi 0, %s170
      %s188 = sphi 0, %s188
      %s190 = sphi 0, %s188
      %s191 = sphi 0, %s190
      %s205 = sphi 0, %s191
      %s209 = sphi 0, %s209
      %s211 = sphi 0, %s209
      %s212 = sphi 0, %s211
      %s226 = sphi 0, %s212
      %s230 = sphi 0, %s230
      %s232 = sphi 0, %s230
      %s233 = sphi 0, %s232
      %s247 = sphi 0, %s233
      %s251 = sphi 0, %s251
      %s253 = sphi 0, %s251
      %s254 = sphi 0, %s253
      %s268 = sphi 0, %s254
      %s272 = sphi 0, %s272
      %s274 = sphi 0, %s272
      %s275 = sphi 0, %s274
      %s289 = sphi 0, %s275
      %s293 = sphi 0, %s293
      %s295 = sphi 0, %s293
      %s296 = sphi 0, %s295
      %s310 = sphi 0, %s296
      %s314 = sphi 0, %s314
      %s316 = sphi 0, %s314
      %s317 = sphi 0, %s316
      %s331 = sphi 0, %s317
      %s337 = sphi 0, %s339
      %s340 = sphi 0, %s337
      %s341 = sphi 0, %s340
      %s357 = sphi 0, %s341
      %s363 = sphi 0, %s365
      %s366 = sphi 0, %s363
      %s367 = sphi 0, %s366
      %s383 = sphi 0, %s367
    $region4: #{vae_forward.1} parent=1 // loop_header_branch
      %26 = sbr.rel (%p24) target = $region8
    $region5: #{vae_forward.1} parent=1 // loop_body
      %s28 = ssub.s32 %s23, 1
      %s29 = ssub.s32 %s23, 2
      %s30 = sadd.s32 %s23, 1
      %s31 = ssub.s32 %s23, %s30
      %p32 = scmp.eq.s32.totalorder %s31, 0
      %s34 = sadd.s32 %s33, 1
      %s35 = scalar_select %p32, %s33, %s34
      %p38 = pneg %p32
      %p39 = scmp.eq.s32.totalorder %s23, 3
      %p40 = por %p38, %p39
      %p41 = scmp.ne.s32.totalorder %s33, %s36
      %p42 = scmp.eq.s32.totalorder %s23, 0
      %p43 = por %p41, %p42
      %p44 = scmp.ne.s32.totalorder %s33, %s36
      %p45 = scmp.eq.s32.totalorder %s28, 3
      %p46 = por %p44, %p45
      %p47 = scmp.ne.s32.totalorder %s36, %s37
      %p48 = scmp.eq.s32.totalorder %s28, 0
      %p49 = por %p47, %p48
      %p50 = scmp.ne.s32.totalorder %s36, %s37
      %p51 = scmp.eq.s32.totalorder %s29, 3
      %p52 = por %p50, %p51
      %p54 = scmp.ne.s32.totalorder %s37, %s53
      %p55 = scmp.eq.s32.totalorder %s29, 0
      %p56 = por %p54, %p55
      %s57 = ssub.s32 %s23, %s30
      %p58 = scmp.eq.s32.totalorder %s57, 0
      %s60 = sadd.s32 %s59, 1
      %s61 = scalar_select %p58, %s59, %s60
      %p64 = pneg %p58
      %p65 = scmp.eq.s32.totalorder %s23, 3
      %p66 = por %p64, %p65
      %p67 = scmp.ne.s32.totalorder %s59, %s62
      %p68 = scmp.eq.s32.totalorder %s23, 0
      %p69 = por %p67, %p68
      %p70 = scmp.ne.s32.totalorder %s59, %s62
      %p71 = scmp.eq.s32.totalorder %s28, 3
      %p72 = por %p70, %p71
      %p73 = scmp.ne.s32.totalorder %s62, %s63
      %p74 = scmp.eq.s32.totalorder %s28, 0
      %p75 = por %p73, %p74
      %p76 = scmp.ne.s32.totalorder %s62, %s63
      %p77 = scmp.eq.s32.totalorder %s29, 3
      %p78 = por %p76, %p77
      %p80 = scmp.ne.s32.totalorder %s63, %s79
      %p81 = scmp.eq.s32.totalorder %s29, 0
      %p82 = por %p80, %p81
      %s84 = sadd.s32 %s83, 1
      %p87 = scmp.eq.s32.totalorder %s23, 3
      %p88 = scmp.ne.s32.totalorder %s83, %s85
      %p89 = scmp.eq.s32.totalorder %s23, 0
      %p90 = por %p88, %p89
      %p91 = scmp.ne.s32.totalorder %s83, %s85
      %p92 = scmp.eq.s32.totalorder %s28, 3
      %p93 = por %p91, %p92
      %p94 = scmp.ne.s32.totalorder %s85, %s86
      %p95 = scmp.eq.s32.totalorder %s28, 0
      %p96 = por %p94, %p95
      %p97 = scmp.ne.s32.totalorder %s85, %s86
      %p98 = scmp.eq.s32.totalorder %s29, 3
      %p99 = por %p97, %p98
      %p101 = scmp.ne.s32.totalorder %s86, %s100
      %p102 = scmp.eq.s32.totalorder %s29, 0
      %p103 = por %p101, %p102
      %s105 = sadd.s32 %s104, 1
      %p108 = scmp.eq.s32.totalorder %s23, 3
      %p109 = scmp.ne.s32.totalorder %s104, %s106
      %p110 = scmp.eq.s32.totalorder %s23, 0
      %p111 = por %p109, %p110
      %p112 = scmp.ne.s32.totalorder %s104, %s106
      %p113 = scmp.eq.s32.totalorder %s28, 3
      %p114 = por %p112, %p113
      %p115 = scmp.ne.s32.totalorder %s106, %s107
      %p116 = scmp.eq.s32.totalorder %s28, 0
      %p117 = por %p115, %p116
      %p118 = scmp.ne.s32.totalorder %s106, %s107
      %p119 = scmp.eq.s32.totalorder %s29, 3
      %p120 = por %p118, %p119
      %p122 = scmp.ne.s32.totalorder %s107, %s121
      %p123 = scmp.eq.s32.totalorder %s29, 0
      %p124 = por %p122, %p123
      %s126 = sadd.s32 %s125, 1
      %p129 = scmp.eq.s32.totalorder %s23, 3
      %p130 = scmp.ne.s32.totalorder %s125, %s127
      %p131 = scmp.eq.s32.totalorder %s23, 0
      %p132 = por %p130, %p131
      %p133 = scmp.ne.s32.totalorder %s125, %s127
      %p134 = scmp.eq.s32.totalorder %s28, 3
      %p135 = por %p133, %p134
      %p136 = scmp.ne.s32.totalorder %s127, %s128
      %p137 = scmp.eq.s32.totalorder %s28, 0
      %p138 = por %p136, %p137
      %p139 = scmp.ne.s32.totalorder %s127, %s128
      %p140 = scmp.eq.s32.totalorder %s29, 3
      %p141 = por %p139, %p140
      %p143 = scmp.ne.s32.totalorder %s128, %s142
      %p144 = scmp.eq.s32.totalorder %s29, 0
      %p145 = por %p143, %p144
      %s147 = sadd.s32 %s146, 1
      %p150 = scmp.eq.s32.totalorder %s23, 3
      %p151 = scmp.ne.s32.totalorder %s146, %s148
      %p152 = scmp.eq.s32.totalorder %s23, 0
      %p153 = por %p151, %p152
      %p154 = scmp.ne.s32.totalorder %s146, %s148
      %p155 = scmp.eq.s32.totalorder %s28, 3
      %p156 = por %p154, %p155
      %p157 = scmp.ne.s32.totalorder %s148, %s149
      %p158 = scmp.eq.s32.totalorder %s28, 0
      %p159 = por %p157, %p158
      %p160 = scmp.ne.s32.totalorder %s148, %s149
      %p161 = scmp.eq.s32.totalorder %s29, 3
      %p162 = por %p160, %p161
      %p164 = scmp.ne.s32.totalorder %s149, %s163
      %p165 = scmp.eq.s32.totalorder %s29, 0
      %p166 = por %p164, %p165
      %s168 = sadd.s32 %s167, 1
      %p171 = scmp.eq.s32.totalorder %s23, 3
      %p172 = scmp.ne.s32.totalorder %s167, %s169
      %p173 = scmp.eq.s32.totalorder %s23, 0
      %p174 = por %p172, %p173
      %p175 = scmp.ne.s32.totalorder %s167, %s169
      %p176 = scmp.eq.s32.totalorder %s28, 3
      %p177 = por %p175, %p176
      %p178 = scmp.ne.s32.totalorder %s169, %s170
      %p179 = scmp.eq.s32.totalorder %s28, 0
      %p180 = por %p178, %p179
      %p181 = scmp.ne.s32.totalorder %s169, %s170
      %p182 = scmp.eq.s32.totalorder %s29, 3
      %p183 = por %p181, %p182
      %p185 = scmp.ne.s32.totalorder %s170, %s184
      %p186 = scmp.eq.s32.totalorder %s29, 0
      %p187 = por %p185, %p186
      %s189 = sadd.s32 %s188, 1
      %p192 = scmp.eq.s32.totalorder %s23, 3
      %p193 = scmp.ne.s32.totalorder %s188, %s190
      %p194 = scmp.eq.s32.totalorder %s23, 0
      %p195 = por %p193, %p194
      %p196 = scmp.ne.s32.totalorder %s188, %s190
      %p197 = scmp.eq.s32.totalorder %s28, 3
      %p198 = por %p196, %p197
      %p199 = scmp.ne.s32.totalorder %s190, %s191
      %p200 = scmp.eq.s32.totalorder %s28, 0
      %p201 = por %p199, %p200
      %p202 = scmp.ne.s32.totalorder %s190, %s191
      %p203 = scmp.eq.s32.totalorder %s29, 3
      %p204 = por %p202, %p203
      %p206 = scmp.ne.s32.totalorder %s191, %s205
      %p207 = scmp.eq.s32.totalorder %s29, 0
      %p208 = por %p206, %p207
      %s210 = sadd.s32 %s209, 1
      %p213 = scmp.eq.s32.totalorder %s23, 3
      %p214 = scmp.ne.s32.totalorder %s209, %s211
      %p215 = scmp.eq.s32.totalorder %s23, 0
      %p216 = por %p214, %p215
      %p217 = scmp.ne.s32.totalorder %s209, %s211
      %p218 = scmp.eq.s32.totalorder %s28, 3
      %p219 = por %p217, %p218
      %p220 = scmp.ne.s32.totalorder %s211, %s212
      %p221 = scmp.eq.s32.totalorder %s28, 0
      %p222 = por %p220, %p221
      %p223 = scmp.ne.s32.totalorder %s211, %s212
      %p224 = scmp.eq.s32.totalorder %s29, 3
      %p225 = por %p223, %p224
      %p227 = scmp.ne.s32.totalorder %s212, %s226
      %p228 = scmp.eq.s32.totalorder %s29, 0
      %p229 = por %p227, %p228
      %s231 = sadd.s32 %s230, 1
      %p234 = scmp.eq.s32.totalorder %s23, 3
      %p235 = scmp.ne.s32.totalorder %s230, %s232
      %p236 = scmp.eq.s32.totalorder %s23, 0
      %p237 = por %p235, %p236
      %p238 = scmp.ne.s32.totalorder %s230, %s232
      %p239 = scmp.eq.s32.totalorder %s28, 3
      %p240 = por %p238, %p239
      %p241 = scmp.ne.s32.totalorder %s232, %s233
      %p242 = scmp.eq.s32.totalorder %s28, 0
      %p243 = por %p241, %p242
      %p244 = scmp.ne.s32.totalorder %s232, %s233
      %p245 = scmp.eq.s32.totalorder %s29, 3
      %p246 = por %p244, %p245
      %p248 = scmp.ne.s32.totalorder %s233, %s247
      %p249 = scmp.eq.s32.totalorder %s29, 0
      %p250 = por %p248, %p249
      %s252 = sadd.s32 %s251, 1
      %p255 = scmp.eq.s32.totalorder %s23, 3
      %p256 = scmp.ne.s32.totalorder %s251, %s253
      %p257 = scmp.eq.s32.totalorder %s23, 0
      %p258 = por %p256, %p257
      %p259 = scmp.ne.s32.totalorder %s251, %s253
      %p260 = scmp.eq.s32.totalorder %s28, 3
      %p261 = por %p259, %p260
      %p262 = scmp.ne.s32.totalorder %s253, %s254
      %p263 = scmp.eq.s32.totalorder %s28, 0
      %p264 = por %p262, %p263
      %p265 = scmp.ne.s32.totalorder %s253, %s254
      %p266 = scmp.eq.s32.totalorder %s29, 3
      %p267 = por %p265, %p266
      %p269 = scmp.ne.s32.totalorder %s254, %s268
      %p270 = scmp.eq.s32.totalorder %s29, 0
      %p271 = por %p269, %p270
      %s273 = sadd.s32 %s272, 1
      %p276 = scmp.eq.s32.totalorder %s23, 3
      %p277 = scmp.ne.s32.totalorder %s272, %s274
      %p278 = scmp.eq.s32.totalorder %s23, 0
      %p279 = por %p277, %p278
      %p280 = scmp.ne.s32.totalorder %s272, %s274
      %p281 = scmp.eq.s32.totalorder %s28, 3
      %p282 = por %p280, %p281
      %p283 = scmp.ne.s32.totalorder %s274, %s275
      %p284 = scmp.eq.s32.totalorder %s28, 0
      %p285 = por %p283, %p284
      %p286 = scmp.ne.s32.totalorder %s274, %s275
      %p287 = scmp.eq.s32.totalorder %s29, 3
      %p288 = por %p286, %p287
      %p290 = scmp.ne.s32.totalorder %s275, %s289
      %p291 = scmp.eq.s32.totalorder %s29, 0
      %p292 = por %p290, %p291
      %s294 = sadd.s32 %s293, 1
      %p297 = scmp.eq.s32.totalorder %s23, 3
      %p298 = scmp.ne.s32.totalorder %s293, %s295
      %p299 = scmp.eq.s32.totalorder %s23, 0
      %p300 = por %p298, %p299
      %p301 = scmp.ne.s32.totalorder %s293, %s295
      %p302 = scmp.eq.s32.totalorder %s28, 3
      %p303 = por %p301, %p302
      %p304 = scmp.ne.s32.totalorder %s295, %s296
      %p305 = scmp.eq.s32.totalorder %s28, 0
      %p306 = por %p304, %p305
      %p307 = scmp.ne.s32.totalorder %s295, %s296
      %p308 = scmp.eq.s32.totalorder %s29, 3
      %p309 = por %p307, %p308
      %p311 = scmp.ne.s32.totalorder %s296, %s310
      %p312 = scmp.eq.s32.totalorder %s29, 0
      %p313 = por %p311, %p312
      %s315 = sadd.s32 %s314, 1
      %p318 = scmp.eq.s32.totalorder %s23, 3
      %p319 = scmp.ne.s32.totalorder %s314, %s316
      %p320 = scmp.eq.s32.totalorder %s23, 0
      %p321 = por %p319, %p320
      %p322 = scmp.ne.s32.totalorder %s314, %s316
      %p323 = scmp.eq.s32.totalorder %s28, 3
      %p324 = por %p322, %p323
      %p325 = scmp.ne.s32.totalorder %s316, %s317
      %p326 = scmp.eq.s32.totalorder %s28, 0
      %p327 = por %p325, %p326
      %p328 = scmp.ne.s32.totalorder %s316, %s317
      %p329 = scmp.eq.s32.totalorder %s29, 3
      %p330 = por %p328, %p329
      %p332 = scmp.ne.s32.totalorder %s317, %s331
      %p333 = scmp.eq.s32.totalorder %s29, 0
      %p334 = por %p332, %p333
      %s335 = ssub.s32 %s23, %s30
      %p336 = scmp.eq.s32.totalorder %s335, 0
      %s338 = sadd.s32 %s337, 1
      %s339 = scalar_select %p336, %s337, %s338
      %p342 = pneg %p336
      %p343 = scmp.eq.s32.totalorder %s23, 3
      %p344 = por %p342, %p343
      %p345 = scmp.ne.s32.totalorder %s337, %s340
      %p346 = scmp.eq.s32.totalorder %s23, 0
      %p347 = por %p345, %p346
      %p348 = scmp.ne.s32.totalorder %s337, %s340
      %p349 = scmp.eq.s32.totalorder %s28, 3
      %p350 = por %p348, %p349
      %p351 = scmp.ne.s32.totalorder %s340, %s341
      %p352 = scmp.eq.s32.totalorder %s28, 0
      %p353 = por %p351, %p352
      %p354 = scmp.ne.s32.totalorder %s340, %s341
      %p355 = scmp.eq.s32.totalorder %s29, 3
      %p356 = por %p354, %p355
      %p358 = scmp.ne.s32.totalorder %s341, %s357
      %p359 = scmp.eq.s32.totalorder %s29, 0
      %p360 = por %p358, %p359
      %s361 = ssub.s32 %s23, %s30
      %p362 = scmp.eq.s32.totalorder %s361, 0
      %s364 = sadd.s32 %s363, 1
      %s365 = scalar_select %p362, %s363, %s364
      %p368 = pneg %p362
      %p369 = scmp.eq.s32.totalorder %s23, 3
      %p370 = por %p368, %p369
      %p371 = scmp.ne.s32.totalorder %s363, %s366
      %p372 = scmp.eq.s32.totalorder %s23, 0
      %p373 = por %p371, %p372
      %p374 = scmp.ne.s32.totalorder %s363, %s366
      %p375 = scmp.eq.s32.totalorder %s28, 3
      %p376 = por %p374, %p375
      %p377 = scmp.ne.s32.totalorder %s366, %s367
      %p378 = scmp.eq.s32.totalorder %s28, 0
      %p379 = por %p377, %p378
      %p380 = scmp.ne.s32.totalorder %s366, %s367
      %p381 = scmp.eq.s32.totalorder %s29, 3
      %p382 = por %p380, %p381
      %p384 = scmp.ne.s32.totalorder %s367, %s383
      %p385 = scmp.eq.s32.totalorder %s29, 0
      %p386 = por %p384, %p385
      %p387 = scmp.le.s32.totalorder 1, %s23
      %p388 = scmp.lt.s32.totalorder %s23, 5
      %p389 = pnand %p387, %p388
      %p390 = pneg %p389
      // Predicated region
      $region9: #{vae_forward.1} parent=5 // pred_check
        _
      $region10: #{vae_forward.1} parent=5 // pred_check_branch
        %392 = sbr.rel (%p389) target = $region12
      $region11: #{vae_forward.1} parent=5 // pred_region
        %s393 = ssub.s32 %s23, 1
        // Predicated region
        $region13: #{vae_forward.1} parent=11 // pred_check
          %p394 = pneg %p96
        $region14: #{vae_forward.1} parent=11 // pred_check_branch
          %396 = sbr.rel (%p394) target = $region16
        $region15: #{vae_forward.1} parent=11 // pred_region
          _
        $region16: #{vae_forward.1} parent=11 // pred_fallthru
          _
        // Predicated region
        $region17: #{vae_forward.1} parent=11 // pred_check
          %p397 = pneg %p117
        $region18: #{vae_forward.1} parent=11 // pred_check_branch
          %399 = sbr.rel (%p397) target = $region20
        $region19: #{vae_forward.1} parent=11 // pred_region
          _
        $region20: #{vae_forward.1} parent=11 // pred_fallthru
          _
        // Predicated region
        $region21: #{vae_forward.1} parent=11 // pred_check
          %p400 = pneg %p138
        $region22: #{vae_forward.1} parent=11 // pred_check_branch
          %402 = sbr.rel (%p400) target = $region24
        $region23: #{vae_forward.1} parent=11 // pred_region
          _
        $region24: #{vae_forward.1} parent=11 // pred_fallthru
          _
        // Predicated region
        $region25: #{vae_forward.1} parent=11 // pred_check
          %p403 = pneg %p159
        $region26: #{vae_forward.1} parent=11 // pred_check_branch
          %405 = sbr.rel (%p403) target = $region28
        $region27: #{vae_forward.1} parent=11 // pred_region
          _
        $region28: #{vae_forward.1} parent=11 // pred_fallthru
          _
        // Predicated region
        $region29: #{vae_forward.1} parent=11 // pred_check
          %p406 = pneg %p180
        $region30: #{vae_forward.1} parent=11 // pred_check_branch
          %408 = sbr.rel (%p406) target = $region32
        $region31: #{vae_forward.1} parent=11 // pred_region
          _
        $region32: #{vae_forward.1} parent=11 // pred_fallthru
          _
        // Predicated region
        $region33: #{vae_forward.1} parent=11 // pred_check
          %p409 = pneg %p201
        $region34: #{vae_forward.1} parent=11 // pred_check_branch
          %411 = sbr.rel (%p409) target = $region36
        $region35: #{vae_forward.1} parent=11 // pred_region
          %s413 = ssub.s32 16, 16
          %414 = vsyncadd [#allocation3], %s413
          %s416 = sshll.u32 [#allocation2], 4
          %s417 = int_to_ptr.vmem [resolvable:$true] %s416
          %419 = dma.hbm_to_vmem [thread:$0]  %s7, 16, %s417, [#allocation3]
        $region36: #{vae_forward.1} parent=11 // pred_fallthru
          _
        // Predicated region
        $region37: #{vae_forward.1} parent=11 // pred_check
          %p420 = pneg %p222
        $region38: #{vae_forward.1} parent=11 // pred_check_branch
          %422 = sbr.rel (%p420) target = $region40
        $region39: #{vae_forward.1} parent=11 // pred_region
          _
        $region40: #{vae_forward.1} parent=11 // pred_fallthru
          _
        // Predicated region
        $region41: #{vae_forward.1} parent=11 // pred_check
          %p423 = pneg %p243
        $region42: #{vae_forward.1} parent=11 // pred_check_branch
          %425 = sbr.rel (%p423) target = $region44
        $region43: #{vae_forward.1} parent=11 // pred_region
          _
        $region44: #{vae_forward.1} parent=11 // pred_fallthru
          _
        // Predicated region
        $region45: #{vae_forward.1} parent=11 // pred_check
          %p426 = pneg %p264
        $region46: #{vae_forward.1} parent=11 // pred_check_branch
          %428 = sbr.rel (%p426) target = $region48
        $region47: #{vae_forward.1} parent=11 // pred_region
          _
        $region48: #{vae_forward.1} parent=11 // pred_fallthru
          _
        // Predicated region
        $region49: #{vae_forward.1} parent=11 // pred_check
          %p429 = pneg %p285
        $region50: #{vae_forward.1} parent=11 // pred_check_branch
          %431 = sbr.rel (%p429) target = $region52
        $region51: #{vae_forward.1} parent=11 // pred_region
          _
        $region52: #{vae_forward.1} parent=11 // pred_fallthru
          _
        // Predicated region
        $region53: #{vae_forward.1} parent=11 // pred_check
          %p432 = pneg %p306
        $region54: #{vae_forward.1} parent=11 // pred_check_branch
          %434 = sbr.rel (%p432) target = $region56
        $region55: #{vae_forward.1} parent=11 // pred_region
          _
        $region56: #{vae_forward.1} parent=11 // pred_fallthru
          _
        // Predicated region
        $region57: #{vae_forward.1} parent=11 // pred_check
          %p435 = pneg %p327
        $region58: #{vae_forward.1} parent=11 // pred_check_branch
          %437 = sbr.rel (%p435) target = $region60
        $region59: #{vae_forward.1} parent=11 // pred_region
          _
        $region60: #{vae_forward.1} parent=11 // pred_fallthru
          _
      $region12: #{vae_forward.1} parent=5 // pred_fallthru
        _
      %p438 = scmp.lt.s32.totalorder %s23, 4
      // Predicated region
      $region61: #{vae_forward.1} parent=5 // pred_check
        %p439 = pneg %p438
      $region62: #{vae_forward.1} parent=5 // pred_check_branch
        %441 = sbr.rel (%p439) target = $region64
      $region63: #{vae_forward.1} parent=5 // pred_region
        // Predicated region
        $region65: #{vae_forward.1} parent=63 // pred_check
          %p442 = pneg %p43
        $region66: #{vae_forward.1} parent=63 // pred_check_branch
          %444 = sbr.rel (%p442) target = $region68
        $region67: #{vae_forward.1} parent=63 // pred_region
          %p445 = scmp.lt.s32.totalorder %s23, 3
          %s446 = scalar_select %p445, %s23, 3
          %s447 = smul.addr %s446, 8
          %s448 = scalar_lea.vmem %s0, %s447
        $region68: #{vae_forward.1} parent=63 // pred_fallthru
          _
        // Predicated region
        $region69: #{vae_forward.1} parent=63 // pred_check
          %p449 = pneg %p69
        $region70: #{vae_forward.1} parent=63 // pred_check_branch
          %451 = sbr.rel (%p449) target = $region72
        $region71: #{vae_forward.1} parent=63 // pred_region
          %p452 = scmp.lt.s32.totalorder %s23, 3
          %s453 = scalar_select %p452, %s23, 3
          %s454 = smul.addr %s453, 8
          %s455 = scalar_lea.vmem %s1, %s454
        $region72: #{vae_forward.1} parent=63 // pred_fallthru
          _
      $region64: #{vae_forward.1} parent=5 // pred_fallthru
        _
      %p456 = scmp.le.s32.totalorder 1, %s23
      %p457 = scmp.lt.s32.totalorder %s23, 5
      %p458 = pnand %p456, %p457
      %p459 = pneg %p458
      // Predicated region
      $region73: #{vae_forward.1} parent=5 // pred_check
        _
      $region74: #{vae_forward.1} parent=5 // pred_check_branch
        %461 = sbr.rel (%p458) target = $region76
      $region75: #{vae_forward.1} parent=5 // pred_region
        %s462 = ssub.s32 %s23, 1
        // Predicated region
        $region77: #{vae_forward.1} parent=75 // pred_check
          %p463 = pneg %p201
        $region78: #{vae_forward.1} parent=75 // pred_check_branch
          %465 = sbr.rel (%p463) target = $region80
        $region79: #{vae_forward.1} parent=75 // pred_region
          %466 = dma.done [#allocation3], 16
        $region80: #{vae_forward.1} parent=75 // pred_fallthru
          _
        %p467 = scmp.lt.s32.totalorder %s28, 3
        %s468 = scalar_select %p467, %s28, 3
        %s469 = smul.addr %s468, 8
        %s470 = scalar_lea.vmem %s0, %s469
        %p471 = pneg %p49
        %p472 = pneg %p46
        %p473 = scmp.lt.s32.totalorder %s28, 3
        %s474 = scalar_select %p473, %s28, 3
        %s475 = smul.addr %s474, 8
        %s476 = scalar_lea.vmem %s1, %s475
        %p477 = pneg %p75
        %p478 = pneg %p72
        %p479 = pneg %p96
        %p480 = pneg %p93
        %p481 = pneg %p117
        %p482 = pneg %p114
        %p483 = pneg %p138
        %p484 = pneg %p135
        %p485 = pneg %p159
        %p486 = pneg %p156
        %p487 = pneg %p180
        %p488 = pneg %p177
        %p489 = pneg %p201
        %p490 = pneg %p198
        %p491 = pneg %p222
        %p492 = pneg %p219
        %p493 = pneg %p243
        %p494 = pneg %p240
        %p495 = pneg %p264
        %p496 = pneg %p261
        %p497 = pneg %p285
        %p498 = pneg %p282
        %p499 = pneg %p306
        %p500 = pneg %p303
        %p501 = pneg %p327
        %p502 = pneg %p324
        %p503 = pneg %p353
        %p504 = pneg %p350
        %p505 = scmp.lt.s32.totalorder %s28, 3
        %s506 = scalar_select %p505, %s28, 3
        %s507 = smul.addr %s506, 8
        %s508 = scalar_lea.vmem %s14, %s507
        %p509 = pneg %p379
        %p510 = pneg %p376
        %p511 = scmp.lt.s32.totalorder %s28, 3
        %s512 = scalar_select %p511, %s28, 3
        %s513 = smul.addr %s512, 8
        %s514 = scalar_lea.vmem %s15, %s513
        %p515 = scmp.lt.s32.totalorder %s28, 3
        %s516 = scalar_select %p515, %s28, 3
        %s517 = smul.addr %s516, 8
        %s518 = scalar_lea.vmem %s0, %s517
        %p519 = scmp.lt.s32.totalorder %s28, 3
        %s520 = scalar_select %p519, %s28, 3
        %s521 = smul.addr %s520, 8
        %s522 = scalar_lea.vmem %s1, %s521
        %p523 = scmp.lt.s32.totalorder %s28, 3
        %s524 = scalar_select %p523, %s28, 3
        %s525 = smul.addr %s524, 8
        %s526 = scalar_lea.vmem %s14, %s525
        %p527 = scmp.lt.s32.totalorder %s28, 3
        %s528 = scalar_select %p527, %s28, 3
        %s529 = smul.addr %s528, 8
        %s530 = scalar_lea.vmem %s15, %s529
        %v531 = vld [vmem:[%s518] sm:$0xff]
        %v532 = vld [vmem:[%s522] sm:$0xff]
        %v533 = vld [vmem:[%s2] sm:$0xff]
        %v534 = vld [vmem:[%s2 + $0x8] sm:$0xff]
        %v535 = vunpack.c.l.bf16 %v533
        %v536 = vunpack.c.h.bf16 %v533
        %v537 = vunpack.c.l.bf16 %v534
        %v538 = vunpack.c.h.bf16 %v534
        %v539 = vld [vmem:[%s3] sm:$0x3]
        %v541 = vlaneseq
        %v542 = vshrl.u32 %v541, 7
        %v543 = vsub.s32 0, %v542
        %v544 = vrot.slane %v539, %v543
        %v545 = vlaneseq
        %v546 = vshrl.u32 %v545, 7
        %v547 = vsub.s32 1, %v546
        %v548 = vrot.slane %v539, %v547
        %vm551 = vcmask 130048
        %v553 = vsel %vm551, %v531, 0
        %555 = vmatprep.subr.mxu0 %v536
        %556 = vmatpush1.msra.mxu0 %v535
        %557 = vmatprep.subr.mxu0 %v538
        %558 = vmatpush1.msra.mxu0 %v537
        %559 = vmatprep.subr.mxu0 0.0
        %560 = vmatpush1.msra.mxu0 0.0
        %561 = vmatprep.subr.mxu0 0.0
        %562 = vmatpush1.msra.mxu0 0.0
        %563 = vmatprep.subr.mxu0 0.0
        %564 = vmatpush1.msra.mxu0 0.0
        %565 = vmatprep.subr.mxu0 0.0
        %566 = vmatpush1.msra.mxu0 0.0
        %567 = vmatprep.subr.mxu0 0.0
        %568 = vmatpush1.msra.mxu0 0.0
        %569 = vmatprep.subr.mxu0 0.0
        %570 = vmatpush1.msra.mxu0 0.0
        %571 = vmatprep.subr.mxu0 0.0
        %572 = vmatpush1.msra.mxu0 0.0
        %573 = vmatprep.subr.mxu0 0.0
        %574 = vmatpush1.msra.mxu0 0.0
        %575 = vmatprep.subr.mxu0 0.0
        %576 = vmatpush1.msra.mxu0 0.0
        %577 = vmatprep.subr.mxu0 0.0
        %578 = vmatpush1.msra.mxu0 0.0
        %579 = vmatprep.subr.mxu0 0.0
        %580 = vmatpush1.msra.mxu0 0.0
        %581 = vmatprep.subr.mxu0 0.0
        %582 = vmatpush1.msra.mxu0 0.0
        %583 = vmatprep.subr.mxu0 0.0
        %584 = vmatpush1.msra.mxu0 0.0
        %585 = vmatprep.subr.mxu0 0.0
        %586 = vmatpush1.msra.mxu0 0.0
        %587 = vmatprep.subr.mxu0 0.0
        %588 = vmatpush1.msra.mxu0 0.0
        %589 = vmatprep.subr.mxu0 0.0
        %590 = vmatpush1.msra.mxu0 0.0
        %591 = vmatprep.subr.mxu0 0.0
        %592 = vmatpush1.msra.mxu0 0.0
        %593 = vmatprep.subr.mxu0 0.0
        %594 = vmatpush1.msra.mxu0 0.0
        %595 = vmatprep.subr.mxu0 0.0
        %596 = vmatpush1.msra.mxu0 0.0
        %597 = vmatprep.subr.mxu0 0.0
        %598 = vmatpush1.msra.mxu0 0.0
        %599 = vmatprep.subr.mxu0 0.0
        %600 = vmatpush1.msra.mxu0 0.0
        %601 = vmatprep.subr.mxu0 0.0
        %602 = vmatpush1.msra.mxu0 0.0
        %603 = vmatprep.subr.mxu0 0.0
        %604 = vmatpush1.msra.mxu0 0.0
        %605 = vmatprep.subr.mxu0 0.0
        %606 = vmatpush1.msra.mxu0 0.0
        %607 = vmatprep.subr.mxu0 0.0
        %608 = vmatpush1.msra.mxu0 0.0
        %609 = vmatprep.subr.mxu0 0.0
        %610 = vmatpush1.msra.mxu0 0.0
        %611 = vmatprep.subr.mxu0 0.0
        %612 = vmatpush1.msra.mxu0 0.0
        %613 = vmatprep.subr.mxu0 0.0
        %614 = vmatpush1.msra.mxu0 0.0
        %615 = vmatprep.subr.mxu0 0.0
        %616 = vmatpush1.msra.mxu0 0.0
        %617 = vmatprep.subr.mxu0 0.0
        %618 = vmatpush1.msra.mxu0 0.0
        %619 = vmatprep.mubr.f32.mxu0 0.0
        %620 = vmatmul.mubr.f32.gmra.mrb[0].mxu0 %v553
        %v621 = vpop.f32.mrb[0].mxu0
        %v622 = vadd.f32 %v544, %v621
        %v623 = vpop.f32.mrb[0].mxu0
        %v624 = vadd.f32 %v548, %v623
        %625 = vdwg.mxu0
        %v626 = vmax.f32 %v622, 0.0
        %v627 = vmax.f32 %v624, 0.0
        %v628 = vld [vmem:[%s4] sm:$0xf]
        %v629 = vld [vmem:[%s4 + $0x4] sm:$0xf]
        %v630 = vld [vmem:[%s4 + $0x8] sm:$0xf]
        %v631 = vld [vmem:[%s4 + $0xc] sm:$0xf]
        %v632 = vld [vmem:[%s4 + $0x10] sm:$0xf]
        %v633 = vld [vmem:[%s4 + $0x14] sm:$0xf]
        %v634 = vld [vmem:[%s4 + $0x18] sm:$0xf]
        %v635 = vld [vmem:[%s4 + $0x1c] sm:$0xf]
        %v636 = vld [vmem:[%s4 + $0x20] sm:$0xf]
        %v637 = vld [vmem:[%s4 + $0x24] sm:$0xf]
        %v638 = vld [vmem:[%s4 + $0x28] sm:$0xf]
        %v639 = vld [vmem:[%s4 + $0x2c] sm:$0xf]
        %v640 = vld [vmem:[%s4 + $0x30] sm:$0xf]
        %v641 = vld [vmem:[%s4 + $0x34] sm:$0xf]
        %v642 = vld [vmem:[%s4 + $0x38] sm:$0xf]
        %v643 = vld [vmem:[%s4 + $0x3c] sm:$0xf]
        %v644 = vld [vmem:[%s4 + $0x40] sm:$0xf]
        %v645 = vld [vmem:[%s4 + $0x44] sm:$0xf]
        %v646 = vld [vmem:[%s4 + $0x48] sm:$0xf]
        %v647 = vld [vmem:[%s4 + $0x4c] sm:$0xf]
        %v648 = vld [vmem:[%s4 + $0x50] sm:$0xf]
        %v649 = vld [vmem:[%s4 + $0x54] sm:$0xf]
        %v650 = vld [vmem:[%s4 + $0x58] sm:$0xf]
        %v651 = vld [vmem:[%s4 + $0x5c] sm:$0xf]
        %v652 = vld [vmem:[%s4 + $0x60] sm:$0xf]
        %v653 = vld [vmem:[%s4 + $0x64] sm:$0xf]
        %v654 = vld [vmem:[%s4 + $0x68] sm:$0xf]
        %v655 = vld [vmem:[%s4 + $0x6c] sm:$0xf]
        %v656 = vld [vmem:[%s4 + $0x70] sm:$0xf]
        %v657 = vld [vmem:[%s4 + $0x74] sm:$0xf]
        %v658 = vld [vmem:[%s4 + $0x78] sm:$0xf]
        %v659 = vld [vmem:[%s4 + $0x7c] sm:$0xf]
        %v660 = vunpack.c.l.bf16 %v628
        %v661 = vunpack.c.l.bf16 %v629
        %v662 = vunpack.c.l.bf16 %v630
        %v663 = vunpack.c.l.bf16 %v631
        %v664 = vunpack.c.l.bf16 %v632
        %v665 = vunpack.c.l.bf16 %v633
        %v666 = vunpack.c.l.bf16 %v634
        %v667 = vunpack.c.l.bf16 %v635
        %v668 = vunpack.c.l.bf16 %v636
        %v669 = vunpack.c.l.bf16 %v637
        %v670 = vunpack.c.l.bf16 %v638
        %v671 = vunpack.c.l.bf16 %v639
        %v672 = vunpack.c.l.bf16 %v640
        %v673 = vunpack.c.l.bf16 %v641
        %v674 = vunpack.c.l.bf16 %v642
        %v675 = vunpack.c.l.bf16 %v643
        %v676 = vunpack.c.l.bf16 %v644
        %v677 = vunpack.c.l.bf16 %v645
        %v678 = vunpack.c.l.bf16 %v646
        %v679 = vunpack.c.l.bf16 %v647
        %v680 = vunpack.c.l.bf16 %v648
        %v681 = vunpack.c.l.bf16 %v649
        %v682 = vunpack.c.l.bf16 %v650
        %v683 = vunpack.c.l.bf16 %v651
        %v684 = vunpack.c.l.bf16 %v652
        %v685 = vunpack.c.l.bf16 %v653
        %v686 = vunpack.c.l.bf16 %v654
        %v687 = vunpack.c.l.bf16 %v655
        %v688 = vunpack.c.l.bf16 %v656
        %v689 = vunpack.c.l.bf16 %v657
        %v690 = vunpack.c.l.bf16 %v658
        %v691 = vunpack.c.l.bf16 %v659
        %v692 = vld [vmem:[%s5] sm:$0x1]
        %v694 = vlaneseq
        %v695 = vshrl.u32 %v694, 7
        %v696 = vsub.s32 0, %v695
        %v697 = vrot.slane %v692, %v696
        %699 = vmatprep.subr.mxu0 0.0
        %700 = vmatpush1.msra.mxu0 %v660
        %701 = vmatprep.subr.mxu0 0.0
        %702 = vmatpush1.msra.mxu0 %v661
        %703 = vmatprep.subr.mxu0 0.0
        %704 = vmatpush1.msra.mxu0 %v662
        %705 = vmatprep.subr.mxu0 0.0
        %706 = vmatpush1.msra.mxu0 %v663
        %707 = vmatprep.subr.mxu0 0.0
        %708 = vmatpush1.msra.mxu0 %v664
        %709 = vmatprep.subr.mxu0 0.0
        %710 = vmatpush1.msra.mxu0 %v665
        %711 = vmatprep.subr.mxu0 0.0
        %712 = vmatpush1.msra.mxu0 %v666
        %713 = vmatprep.subr.mxu0 0.0
        %714 = vmatpush1.msra.mxu0 %v667
        %715 = vmatprep.subr.mxu0 0.0
        %716 = vmatpush1.msra.mxu0 %v668
        %717 = vmatprep.subr.mxu0 0.0
        %718 = vmatpush1.msra.mxu0 %v669
        %719 = vmatprep.subr.mxu0 0.0
        %720 = vmatpush1.msra.mxu0 %v670
        %721 = vmatprep.subr.mxu0 0.0
        %722 = vmatpush1.msra.mxu0 %v671
        %723 = vmatprep.subr.mxu0 0.0
        %724 = vmatpush1.msra.mxu0 %v672
        %725 = vmatprep.subr.mxu0 0.0
        %726 = vmatpush1.msra.mxu0 %v673
        %727 = vmatprep.subr.mxu0 0.0
        %728 = vmatpush1.msra.mxu0 %v674
        %729 = vmatprep.subr.mxu0 0.0
        %730 = vmatpush1.msra.mxu0 %v675
        %731 = vmatprep.subr.mxu0 0.0
        %732 = vmatpush1.msra.mxu0 %v676
        %733 = vmatprep.subr.mxu0 0.0
        %734 = vmatpush1.msra.mxu0 %v677
        %735 = vmatprep.subr.mxu0 0.0
        %736 = vmatpush1.msra.mxu0 %v678
        %737 = vmatprep.subr.mxu0 0.0
        %738 = vmatpush1.msra.mxu0 %v679
        %739 = vmatprep.subr.mxu0 0.0
        %740 = vmatpush1.msra.mxu0 %v680
        %741 = vmatprep.subr.mxu0 0.0
        %742 = vmatpush1.msra.mxu0 %v681
        %743 = vmatprep.subr.mxu0 0.0
        %744 = vmatpush1.msra.mxu0 %v682
        %745 = vmatprep.subr.mxu0 0.0
        %746 = vmatpush1.msra.mxu0 %v683
        %747 = vmatprep.subr.mxu0 0.0
        %748 = vmatpush1.msra.mxu0 %v684
        %749 = vmatprep.subr.mxu0 0.0
        %750 = vmatpush1.msra.mxu0 %v685
        %751 = vmatprep.subr.mxu0 0.0
        %752 = vmatpush1.msra.mxu0 %v686
        %753 = vmatprep.subr.mxu0 0.0
        %754 = vmatpush1.msra.mxu0 %v687
        %755 = vmatprep.subr.mxu0 0.0
        %756 = vmatpush1.msra.mxu0 %v688
        %757 = vmatprep.subr.mxu0 0.0
        %758 = vmatpush1.msra.mxu0 %v689
        %759 = vmatprep.subr.mxu0 0.0
        %760 = vmatpush1.msra.mxu0 %v690
        %761 = vmatprep.subr.mxu0 0.0
        %762 = vmatpush1.msra.mxu0 %v691
        %763 = vmatprep.mubr.f32.mxu0 %v627
        %764 = vmatmul.mubr.f32.gmra.mrb[0].mxu0 %v626
        %v765 = vpop.f32.mrb[0].mxu0
        %v766 = vadd.f32 %v697, %v765
        %v767 = vpop.f32.mrb[0].mxu0
        %768 = vdwg.mxu0
        %v769 = vmax.f32 %v766, 0.0
        %v770 = vld [vmem:[%s6] sm:$0xf]
        %v771 = vld [vmem:[%s6 + $0x4] sm:$0xf]
        %v772 = vld [vmem:[%s6 + $0x8] sm:$0xf]
        %v773 = vld [vmem:[%s6 + $0xc] sm:$0xf]
        %v774 = vld [vmem:[%s6 + $0x10] sm:$0xf]
        %v775 = vld [vmem:[%s6 + $0x14] sm:$0xf]
        %v776 = vld [vmem:[%s6 + $0x18] sm:$0xf]
        %v777 = vld [vmem:[%s6 + $0x1c] sm:$0xf]
        %v778 = vld [vmem:[%s6 + $0x20] sm:$0xf]
        %v779 = vld [vmem:[%s6 + $0x24] sm:$0xf]
        %v780 = vld [vmem:[%s6 + $0x28] sm:$0xf]
        %v781 = vld [vmem:[%s6 + $0x2c] sm:$0xf]
        %v782 = vld [vmem:[%s6 + $0x30] sm:$0xf]
        %v783 = vld [vmem:[%s6 + $0x34] sm:$0xf]
        %v784 = vld [vmem:[%s6 + $0x38] sm:$0xf]
        %v785 = vld [vmem:[%s6 + $0x3c] sm:$0xf]
        %v786 = vunpack.c.l.bf16 %v770
        %v787 = vunpack.c.l.bf16 %v771
        %v788 = vunpack.c.l.bf16 %v772
        %v789 = vunpack.c.l.bf16 %v773
        %v790 = vunpack.c.l.bf16 %v774
        %v791 = vunpack.c.l.bf16 %v775
        %v792 = vunpack.c.l.bf16 %v776
        %v793 = vunpack.c.l.bf16 %v777
        %v794 = vunpack.c.l.bf16 %v778
        %v795 = vunpack.c.l.bf16 %v779
        %v796 = vunpack.c.l.bf16 %v780
        %v797 = vunpack.c.l.bf16 %v781
        %v798 = vunpack.c.l.bf16 %v782
        %v799 = vunpack.c.l.bf16 %v783
        %v800 = vunpack.c.l.bf16 %v784
        %v801 = vunpack.c.l.bf16 %v785
        %v802 = vld [vmem:[#allocation2] sm:$0x1]
        %v804 = vlaneseq
        %v805 = vshrl.u32 %v804, 7
        %v806 = vsub.s32 0, %v805
        %v807 = vrot.slane %v802, %v806
        %809 = vmatprep.subr.mxu0 0.0
        %810 = vmatpush1.msra.mxu0 %v786
        %811 = vmatprep.subr.mxu0 0.0
        %812 = vmatpush1.msra.mxu0 %v787
        %813 = vmatprep.subr.mxu0 0.0
        %814 = vmatpush1.msra.mxu0 %v788
        %815 = vmatprep.subr.mxu0 0.0
        %816 = vmatpush1.msra.mxu0 %v789
        %817 = vmatprep.subr.mxu0 0.0
        %818 = vmatpush1.msra.mxu0 %v790
        %819 = vmatprep.subr.mxu0 0.0
        %820 = vmatpush1.msra.mxu0 %v791
        %821 = vmatprep.subr.mxu0 0.0
        %822 = vmatpush1.msra.mxu0 %v792
        %823 = vmatprep.subr.mxu0 0.0
        %824 = vmatpush1.msra.mxu0 %v793
        %825 = vmatprep.subr.mxu0 0.0
        %826 = vmatpush1.msra.mxu0 %v794
        %827 = vmatprep.subr.mxu0 0.0
        %828 = vmatpush1.msra.mxu0 %v795
        %829 = vmatprep.subr.mxu0 0.0
        %830 = vmatpush1.msra.mxu0 %v796
        %831 = vmatprep.subr.mxu0 0.0
        %832 = vmatpush1.msra.mxu0 %v797
        %833 = vmatprep.subr.mxu0 0.0
        %834 = vmatpush1.msra.mxu0 %v798
        %835 = vmatprep.subr.mxu0 0.0
        %836 = vmatpush1.msra.mxu0 %v799
        %837 = vmatprep.subr.mxu0 0.0
        %838 = vmatpush1.msra.mxu0 %v800
        %839 = vmatprep.subr.mxu0 0.0
        %840 = vmatpush1.msra.mxu0 %v801
        %841 = vmatprep.subr.mxu0 0.0
        %842 = vmatpush1.msra.mxu0 0.0
        %843 = vmatprep.subr.mxu0 0.0
        %844 = vmatpush1.msra.mxu0 0.0
        %845 = vmatprep.subr.mxu0 0.0
        %846 = vmatpush1.msra.mxu0 0.0
        %847 = vmatprep.subr.mxu0 0.0
        %848 = vmatpush1.msra.mxu0 0.0
        %849 = vmatprep.subr.mxu0 0.0
        %850 = vmatpush1.msra.mxu0 0.0
        %851 = vmatprep.subr.mxu0 0.0
        %852 = vmatpush1.msra.mxu0 0.0
        %853 = vmatprep.subr.mxu0 0.0
        %854 = vmatpush1.msra.mxu0 0.0
        %855 = vmatprep.subr.mxu0 0.0
        %856 = vmatpush1.msra.mxu0 0.0
        %857 = vmatprep.subr.mxu0 0.0
        %858 = vmatpush1.msra.mxu0 0.0
        %859 = vmatprep.subr.mxu0 0.0
        %860 = vmatpush1.msra.mxu0 0.0
        %861 = vmatprep.subr.mxu0 0.0
        %862 = vmatpush1.msra.mxu0 0.0
        %863 = vmatprep.subr.mxu0 0.0
        %864 = vmatpush1.msra.mxu0 0.0
        %865 = vmatprep.subr.mxu0 0.0
        %866 = vmatpush1.msra.mxu0 0.0
        %867 = vmatprep.subr.mxu0 0.0
        %868 = vmatpush1.msra.mxu0 0.0
        %869 = vmatprep.subr.mxu0 0.0
        %870 = vmatpush1.msra.mxu0 0.0
        %871 = vmatprep.subr.mxu0 0.0
        %872 = vmatpush1.msra.mxu0 0.0
        %873 = vmatprep.mubr.f32.mxu0 0.0
        %874 = vmatmul.mubr.f32.gmra.mrb[0].mxu0 %v769
        %v875 = vpop.f32.mrb[0].mxu0
        %v876 = vadd.f32 %v807, %v875
        %v877 = vpop.f32.mrb[0].mxu0
        %878 = vdwg.mxu0
        %v879 = vmul.f32 %v876, 1.442695
        %v880 = vpow.pop %v879
        %882 = vrot.lane.b32.xlu0 %v880, 120
        %v883 = vpop.permute.xlu0 %882
        %v885 = vmul.f32 %v532, %v883
        %v886 = vadd.f32 %v885, %v876
        %v887 = vld [vmem:[%s8] sm:$0xf]
        %v888 = vunpack.c.l.bf16 %v887
        %v889 = vld [vmem:[%s9] sm:$0x1]
        %v891 = vlaneseq
        %v892 = vshrl.u32 %v891, 7
        %v893 = vsub.s32 0, %v892
        %v894 = vrot.slane %v889, %v893
        %vm896 = vcmask 64512
        %v898 = vsel %vm896, %v886, 0
        %900 = vmatprep.subr.mxu0 0.0
        %901 = vmatpush1.msra.mxu0 %v888
        %902 = vmatprep.subr.mxu0 0.0
        %903 = vmatpush1.msra.mxu0 0.0
        %904 = vmatprep.subr.mxu0 0.0
        %905 = vmatpush1.msra.mxu0 0.0
        %906 = vmatprep.subr.mxu0 0.0
        %907 = vmatpush1.msra.mxu0 0.0
        %908 = vmatprep.subr.mxu0 0.0
        %909 = vmatpush1.msra.mxu0 0.0
        %910 = vmatprep.subr.mxu0 0.0
        %911 = vmatpush1.msra.mxu0 0.0
        %912 = vmatprep.subr.mxu0 0.0
        %913 = vmatpush1.msra.mxu0 0.0
        %914 = vmatprep.subr.mxu0 0.0
        %915 = vmatpush1.msra.mxu0 0.0
        %916 = vmatprep.subr.mxu0 0.0
        %917 = vmatpush1.msra.mxu0 0.0
        %918 = vmatprep.subr.mxu0 0.0
        %919 = vmatpush1.msra.mxu0 0.0
        %920 = vmatprep.subr.mxu0 0.0
        %921 = vmatpush1.msra.mxu0 0.0
        %922 = vmatprep.subr.mxu0 0.0
        %923 = vmatpush1.msra.mxu0 0.0
        %924 = vmatprep.subr.mxu0 0.0
        %925 = vmatpush1.msra.mxu0 0.0
        %926 = vmatprep.subr.mxu0 0.0
        %927 = vmatpush1.msra.mxu0 0.0
        %928 = vmatprep.subr.mxu0 0.0
        %929 = vmatpush1.msra.mxu0 0.0
        %930 = vmatprep.subr.mxu0 0.0
        %931 = vmatpush1.msra.mxu0 0.0
        %932 = vmatprep.subr.mxu0 0.0
        %933 = vmatpush1.msra.mxu0 0.0
        %934 = vmatprep.subr.mxu0 0.0
        %935 = vmatpush1.msra.mxu0 0.0
        %936 = vmatprep.subr.mxu0 0.0
        %937 = vmatpush1.msra.mxu0 0.0
        %938 = vmatprep.subr.mxu0 0.0
        %939 = vmatpush1.msra.mxu0 0.0
        %940 = vmatprep.subr.mxu0 0.0
        %941 = vmatpush1.msra.mxu0 0.0
        %942 = vmatprep.subr.mxu0 0.0
        %943 = vmatpush1.msra.mxu0 0.0
        %944 = vmatprep.subr.mxu0 0.0
        %945 = vmatpush1.msra.mxu0 0.0
        %946 = vmatprep.subr.mxu0 0.0
        %947 = vmatpush1.msra.mxu0 0.0
        %948 = vmatprep.subr.mxu0 0.0
        %949 = vmatpush1.msra.mxu0 0.0
        %950 = vmatprep.subr.mxu0 0.0
        %951 = vmatpush1.msra.mxu0 0.0
        %952 = vmatprep.subr.mxu0 0.0
        %953 = vmatpush1.msra.mxu0 0.0
        %954 = vmatprep.subr.mxu0 0.0
        %955 = vmatpush1.msra.mxu0 0.0
        %956 = vmatprep.subr.mxu0 0.0
        %957 = vmatpush1.msra.mxu0 0.0
        %958 = vmatprep.subr.mxu0 0.0
        %959 = vmatpush1.msra.mxu0 0.0
        %960 = vmatprep.subr.mxu0 0.0
        %961 = vmatpush1.msra.mxu0 0.0
        %962 = vmatprep.subr.mxu0 0.0
        %963 = vmatpush1.msra.mxu0 0.0
        %964 = vmatprep.mubr.f32.mxu0 0.0
        %965 = vmatmul.mubr.f32.gmra.mrb[0].mxu0 %v898
        %v966 = vpop.f32.mrb[0].mxu0
        %v967 = vadd.f32 %v894, %v966
        %v968 = vpop.f32.mrb[0].mxu0
        %969 = vdwg.mxu0
        %v970 = vmax.f32 %v967, 0.0
        %v971 = vld [vmem:[%s10] sm:$0xff]
        %v972 = vld [vmem:[%s10 + $0x8] sm:$0xff]
        %v973 = vld [vmem:[%s10 + $0x10] sm:$0xff]
        %v974 = vld [vmem:[%s10 + $0x18] sm:$0xff]
        %v975 = vld [vmem:[%s10 + $0x20] sm:$0xff]
        %v976 = vld [vmem:[%s10 + $0x28] sm:$0xff]
        %v977 = vld [vmem:[%s10 + $0x30] sm:$0xff]
        %v978 = vld [vmem:[%s10 + $0x38] sm:$0xff]
        %v979 = vld [vmem:[%s10 + $0x40] sm:$0xff]
        %v980 = vld [vmem:[%s10 + $0x48] sm:$0xff]
        %v981 = vld [vmem:[%s10 + $0x50] sm:$0xff]
        %v982 = vld [vmem:[%s10 + $0x58] sm:$0xff]
        %v983 = vld [vmem:[%s10 + $0x60] sm:$0xff]
        %v984 = vld [vmem:[%s10 + $0x68] sm:$0xff]
        %v985 = vld [vmem:[%s10 + $0x70] sm:$0xff]
        %v986 = vld [vmem:[%s10 + $0x78] sm:$0xff]
        %v987 = vunpack.c.l.bf16 %v971
        %v988 = vunpack.c.h.bf16 %v971
        %v989 = vunpack.c.l.bf16 %v972
        %v990 = vunpack.c.h.bf16 %v972
        %v991 = vunpack.c.l.bf16 %v973
        %v992 = vunpack.c.h.bf16 %v973
        %v993 = vunpack.c.l.bf16 %v974
        %v994 = vunpack.c.h.bf16 %v974
        %v995 = vunpack.c.l.bf16 %v975
        %v996 = vunpack.c.h.bf16 %v975
        %v997 = vunpack.c.l.bf16 %v976
        %v998 = vunpack.c.h.bf16 %v976
        %v999 = vunpack.c.l.bf16 %v977
        %v1000 = vunpack.c.h.bf16 %v977
        %v1001 = vunpack.c.l.bf16 %v978
        %v1002 = vunpack.c.h.bf16 %v978
        %v1003 = vunpack.c.l.bf16 %v979
        %v1004 = vunpack.c.h.bf16 %v979
        %v1005 = vunpack.c.l.bf16 %v980
        %v1006 = vunpack.c.h.bf16 %v980
        %v1007 = vunpack.c.l.bf16 %v981
        %v1008 = vunpack.c.h.bf16 %v981
        %v1009 = vunpack.c.l.bf16 %v982
        %v1010 = vunpack.c.h.bf16 %v982
        %v1011 = vunpack.c.l.bf16 %v983
        %v1012 = vunpack.c.h.bf16 %v983
        %v1013 = vunpack.c.l.bf16 %v984
        %v1014 = vunpack.c.h.bf16 %v984
        %v1015 = vunpack.c.l.bf16 %v985
        %v1016 = vunpack.c.h.bf16 %v985
        %v1017 = vunpack.c.l.bf16 %v986
        %v1018 = vunpack.c.h.bf16 %v986
        %v1019 = vld [vmem:[%s11] sm:$0x3]
        %v1021 = vlaneseq
        %v1022 = vshrl.u32 %v1021, 7
        %v1023 = vsub.s32 0, %v1022
        %v1024 = vrot.slane %v1019, %v1023
        %v1025 = vlaneseq
        %v1026 = vshrl.u32 %v1025, 7
        %v1027 = vsub.s32 1, %v1026
        %v1028 = vrot.slane %v1019, %v1027
        %1031 = vmatprep.subr.mxu0 %v988
        %1032 = vmatpush1.msra.mxu0 %v987
        %1033 = vmatprep.subr.mxu0 %v990
        %1034 = vmatpush1.msra.mxu0 %v989
        %1035 = vmatprep.subr.mxu0 %v992
        %1036 = vmatpush1.msra.mxu0 %v991
        %1037 = vmatprep.subr.mxu0 %v994
        %1038 = vmatpush1.msra.mxu0 %v993
        %1039 = vmatprep.subr.mxu0 %v996
        %1040 = vmatpush1.msra.mxu0 %v995
        %1041 = vmatprep.subr.mxu0 %v998
        %1042 = vmatpush1.msra.mxu0 %v997
        %1043 = vmatprep.subr.mxu0 %v1000
        %1044 = vmatpush1.msra.mxu0 %v999
        %1045 = vmatprep.subr.mxu0 %v1002
        %1046 = vmatpush1.msra.mxu0 %v1001
        %1047 = vmatprep.subr.mxu0 %v1004
        %1048 = vmatpush1.msra.mxu0 %v1003
        %1049 = vmatprep.subr.mxu0 %v1006
        %1050 = vmatpush1.msra.mxu0 %v1005
        %1051 = vmatprep.subr.mxu0 %v1008
        %1052 = vmatpush1.msra.mxu0 %v1007
        %1053 = vmatprep.subr.mxu0 %v1010
        %1054 = vmatpush1.msra.mxu0 %v1009
        %1055 = vmatprep.subr.mxu0 %v1012
        %1056 = vmatpush1.msra.mxu0 %v1011
        %1057 = vmatprep.subr.mxu0 %v1014
        %1058 = vmatpush1.msra.mxu0 %v1013
        %1059 = vmatprep.subr.mxu0 %v1016
        %1060 = vmatpush1.msra.mxu0 %v1015
        %1061 = vmatprep.subr.mxu0 %v1018
        %1062 = vmatpush1.msra.mxu0 %v1017
        %1063 = vmatprep.subr.mxu0 0.0
        %1064 = vmatpush1.msra.mxu0 0.0
        %1065 = vmatprep.subr.mxu0 0.0
        %1066 = vmatpush1.msra.mxu0 0.0
        %1067 = vmatprep.subr.mxu0 0.0
        %1068 = vmatpush1.msra.mxu0 0.0
        %1069 = vmatprep.subr.mxu0 0.0
        %1070 = vmatpush1.msra.mxu0 0.0
        %1071 = vmatprep.subr.mxu0 0.0
        %1072 = vmatpush1.msra.mxu0 0.0
        %1073 = vmatprep.subr.mxu0 0.0
        %1074 = vmatpush1.msra.mxu0 0.0
        %1075 = vmatprep.subr.mxu0 0.0
        %1076 = vmatpush1.msra.mxu0 0.0
        %1077 = vmatprep.subr.mxu0 0.0
        %1078 = vmatpush1.msra.mxu0 0.0
        %1079 = vmatprep.subr.mxu0 0.0
        %1080 = vmatpush1.msra.mxu0 0.0
        %1081 = vmatprep.subr.mxu0 0.0
        %1082 = vmatpush1.msra.mxu0 0.0
        %1083 = vmatprep.subr.mxu0 0.0
        %1084 = vmatpush1.msra.mxu0 0.0
        %1085 = vmatprep.subr.mxu0 0.0
        %1086 = vmatpush1.msra.mxu0 0.0
        %1087 = vmatprep.subr.mxu0 0.0
        %1088 = vmatpush1.msra.mxu0 0.0
        %1089 = vmatprep.subr.mxu0 0.0
        %1090 = vmatpush1.msra.mxu0 0.0
        %1091 = vmatprep.subr.mxu0 0.0
        %1092 = vmatpush1.msra.mxu0 0.0
        %1093 = vmatprep.subr.mxu0 0.0
        %1094 = vmatpush1.msra.mxu0 0.0
        %1095 = vmatprep.mubr.f32.mxu0 0.0
        %1096 = vmatmul.mubr.f32.gmra.mrb[0].mxu0 %v970
        %v1097 = vpop.f32.mrb[0].mxu0
        %v1098 = vadd.f32 %v1024, %v1097
        %v1099 = vpop.f32.mrb[0].mxu0
        %v1100 = vadd.f32 %v1028, %v1099
        %1101 = vdwg.mxu0
        %v1102 = vmax.f32 %v1098, 0.0
        %v1103 = vmax.f32 %v1100, 0.0
        %v1104 = vld [vmem:[%s12] sm:$0xf]
        %v1105 = vld [vmem:[%s12 + $0x4] sm:$0xf]
        %v1106 = vld [vmem:[%s12 + $0x8] sm:$0xf]
        %v1107 = vld [vmem:[%s12 + $0xc] sm:$0xf]
        %v1108 = vld [vmem:[%s12 + $0x10] sm:$0xf]
        %v1109 = vld [vmem:[%s12 + $0x14] sm:$0xf]
        %v1110 = vld [vmem:[%s12 + $0x18] sm:$0xf]
        %v1111 = vld [vmem:[%s12 + $0x1c] sm:$0xf]
        %v1112 = vld [vmem:[%s12 + $0x20] sm:$0xf]
        %v1113 = vld [vmem:[%s12 + $0x24] sm:$0xf]
        %v1114 = vld [vmem:[%s12 + $0x28] sm:$0xf]
        %v1115 = vld [vmem:[%s12 + $0x2c] sm:$0xf]
        %v1116 = vld [vmem:[%s12 + $0x30] sm:$0xf]
        %v1117 = vld [vmem:[%s12 + $0x34] sm:$0xf]
        %v1118 = vld [vmem:[%s12 + $0x38] sm:$0xf]
        %v1119 = vld [vmem:[%s12 + $0x3c] sm:$0xf]
        %v1120 = vld [vmem:[%s12 + $0x40] sm:$0xf]
        %v1121 = vld [vmem:[%s12 + $0x44] sm:$0xf]
        %v1122 = vld [vmem:[%s12 + $0x48] sm:$0xf]
        %v1123 = vld [vmem:[%s12 + $0x4c] sm:$0xf]
        %v1124 = vld [vmem:[%s12 + $0x50] sm:$0xf]
        %v1125 = vld [vmem:[%s12 + $0x54] sm:$0xf]
        %v1126 = vld [vmem:[%s12 + $0x58] sm:$0xf]
        %v1127 = vld [vmem:[%s12 + $0x5c] sm:$0xf]
        %v1128 = vld [vmem:[%s12 + $0x60] sm:$0xf]
        %v1129 = vld [vmem:[%s12 + $0x64] sm:$0xf]
        %v1130 = vld [vmem:[%s12 + $0x68] sm:$0xf]
        %v1131 = vld [vmem:[%s12 + $0x6c] sm:$0xf]
        %v1132 = vld [vmem:[%s12 + $0x70] sm:$0xf]
        %v1133 = vld [vmem:[%s12 + $0x74] sm:$0xf]
        %v1134 = vld [vmem:[%s12 + $0x78] sm:$0xf]
        %v1135 = vld [vmem:[%s12 + $0x7c] sm:$0xf]
        %v1136 = vunpack.c.l.bf16 %v1104
        %v1137 = vunpack.c.l.bf16 %v1105
        %v1138 = vunpack.c.l.bf16 %v1106
        %v1139 = vunpack.c.l.bf16 %v1107
        %v1140 = vunpack.c.l.bf16 %v1108
        %v1141 = vunpack.c.l.bf16 %v1109
        %v1142 = vunpack.c.l.bf16 %v1110
        %v1143 = vunpack.c.l.bf16 %v1111
        %v1144 = vunpack.c.l.bf16 %v1112
        %v1145 = vunpack.c.l.bf16 %v1113
        %v1146 = vunpack.c.l.bf16 %v1114
        %v1147 = vunpack.c.l.bf16 %v1115
        %v1148 = vunpack.c.l.bf16 %v1116
        %v1149 = vunpack.c.l.bf16 %v1117
        %v1150 = vunpack.c.l.bf16 %v1118
        %v1151 = vunpack.c.l.bf16 %v1119
        %v1152 = vunpack.c.l.bf16 %v1120
        %v1153 = vunpack.c.l.bf16 %v1121
        %v1154 = vunpack.c.l.bf16 %v1122
        %v1155 = vunpack.c.l.bf16 %v1123
        %v1156 = vunpack.c.l.bf16 %v1124
        %v1157 = vunpack.c.l.bf16 %v1125
        %v1158 = vunpack.c.l.bf16 %v1126
        %v1159 = vunpack.c.l.bf16 %v1127
        %v1160 = vunpack.c.l.bf16 %v1128
        %v1161 = vunpack.c.l.bf16 %v1129
        %v1162 = vunpack.c.l.bf16 %v1130
        %v1163 = vunpack.c.l.bf16 %v1131
        %v1164 = vunpack.c.l.bf16 %v1132
        %v1165 = vunpack.c.l.bf16 %v1133
        %v1166 = vunpack.c.l.bf16 %v1134
        %v1167 = vunpack.c.l.bf16 %v1135
        %v1168 = vld [vmem:[%s13] sm:$0x1]
        %v1170 = vlaneseq
        %v1171 = vshrl.u32 %v1170, 7
        %v1172 = vsub.s32 0, %v1171
        %v1173 = vrot.slane %v1168, %v1172
        %1175 = vmatprep.subr.mxu0 0.0
        %1176 = vmatpush1.msra.mxu0 %v1136
        %1177 = vmatprep.subr.mxu0 0.0
        %1178 = vmatpush1.msra.mxu0 %v1137
        %1179 = vmatprep.subr.mxu0 0.0
        %1180 = vmatpush1.msra.mxu0 %v1138
        %1181 = vmatprep.subr.mxu0 0.0
        %1182 = vmatpush1.msra.mxu0 %v1139
        %1183 = vmatprep.subr.mxu0 0.0
        %1184 = vmatpush1.msra.mxu0 %v1140
        %1185 = vmatprep.subr.mxu0 0.0
        %1186 = vmatpush1.msra.mxu0 %v1141
        %1187 = vmatprep.subr.mxu0 0.0
        %1188 = vmatpush1.msra.mxu0 %v1142
        %1189 = vmatprep.subr.mxu0 0.0
        %1190 = vmatpush1.msra.mxu0 %v1143
        %1191 = vmatprep.subr.mxu0 0.0
        %1192 = vmatpush1.msra.mxu0 %v1144
        %1193 = vmatprep.subr.mxu0 0.0
        %1194 = vmatpush1.msra.mxu0 %v1145
        %1195 = vmatprep.subr.mxu0 0.0
        %1196 = vmatpush1.msra.mxu0 %v1146
        %1197 = vmatprep.subr.mxu0 0.0
        %1198 = vmatpush1.msra.mxu0 %v1147
        %1199 = vmatprep.subr.mxu0 0.0
        %1200 = vmatpush1.msra.mxu0 %v1148
        %1201 = vmatprep.subr.mxu0 0.0
        %1202 = vmatpush1.msra.mxu0 %v1149
        %1203 = vmatprep.subr.mxu0 0.0
        %1204 = vmatpush1.msra.mxu0 %v1150
        %1205 = vmatprep.subr.mxu0 0.0
        %1206 = vmatpush1.msra.mxu0 %v1151
        %1207 = vmatprep.subr.mxu0 0.0
        %1208 = vmatpush1.msra.mxu0 %v1152
        %1209 = vmatprep.subr.mxu0 0.0
        %1210 = vmatpush1.msra.mxu0 %v1153
        %1211 = vmatprep.subr.mxu0 0.0
        %1212 = vmatpush1.msra.mxu0 %v1154
        %1213 = vmatprep.subr.mxu0 0.0
        %1214 = vmatpush1.msra.mxu0 %v1155
        %1215 = vmatprep.subr.mxu0 0.0
        %1216 = vmatpush1.msra.mxu0 %v1156
        %1217 = vmatprep.subr.mxu0 0.0
        %1218 = vmatpush1.msra.mxu0 %v1157
        %1219 = vmatprep.subr.mxu0 0.0
        %1220 = vmatpush1.msra.mxu0 %v1158
        %1221 = vmatprep.subr.mxu0 0.0
        %1222 = vmatpush1.msra.mxu0 %v1159
        %1223 = vmatprep.subr.mxu0 0.0
        %1224 = vmatpush1.msra.mxu0 %v1160
        %1225 = vmatprep.subr.mxu0 0.0
        %1226 = vmatpush1.msra.mxu0 %v1161
        %1227 = vmatprep.subr.mxu0 0.0
        %1228 = vmatpush1.msra.mxu0 %v1162
        %1229 = vmatprep.subr.mxu0 0.0
        %1230 = vmatpush1.msra.mxu0 %v1163
        %1231 = vmatprep.subr.mxu0 0.0
        %1232 = vmatpush1.msra.mxu0 %v1164
        %1233 = vmatprep.subr.mxu0 0.0
        %1234 = vmatpush1.msra.mxu0 %v1165
        %1235 = vmatprep.subr.mxu0 0.0
        %1236 = vmatpush1.msra.mxu0 %v1166
        %1237 = vmatprep.subr.mxu0 0.0
        %1238 = vmatpush1.msra.mxu0 %v1167
        %1239 = vmatprep.mubr.f32.mxu0 %v1103
        %1240 = vmatmul.mubr.f32.gmra.mrb[0].mxu0 %v1102
        %v1241 = vpop.f32.mrb[0].mxu0
        %v1242 = vadd.f32 %v1173, %v1241
        %v1243 = vpop.f32.mrb[0].mxu0
        %1244 = vdwg.mxu0
        %v1245 = vxor.u32 %v1242, 2147483648
        %v1246 = vmul.f32 %v1245, 1.442695
        %v1247 = vpow.pop %v1246
        %v1248 = vadd.f32 %v1247, 1.0
        %v1249 = vrcp.pop %v1248
        %v1250 = vmul.f32 1.0, %v1249
        %1251 = vst.msk [vmem:[%s526] sm:$0xff] %vm551, %v1250
        %1252 = vst.msk [vmem:[%s530] sm:$0xff] %vm551, %v876
        %p1253 = scmp.lt.s32.totalorder %s28, 3
        %s1254 = scalar_select %p1253, %s28, 3
        %s1255 = smul.addr %s1254, 8
        %s1256 = scalar_lea.vmem %s14, %s1255
        %p1257 = scmp.lt.s32.totalorder %s28, 3
        %s1258 = scalar_select %p1257, %s28, 3
        %s1259 = smul.addr %s1258, 8
        %s1260 = scalar_lea.vmem %s15, %s1259
        // Predicated region
        $region81: #{vae_forward.1} parent=75 // pred_check
          %p1261 = pneg %p350
        $region82: #{vae_forward.1} parent=75 // pred_check_branch
          %1263 = sbr.rel (%p1261) target = $region84
        $region83: #{vae_forward.1} parent=75 // pred_region
          _
        $region84: #{vae_forward.1} parent=75 // pred_fallthru
          _
        // Predicated region
        $region85: #{vae_forward.1} parent=75 // pred_check
          %p1264 = pneg %p376
        $region86: #{vae_forward.1} parent=75 // pred_check_branch
          %1266 = sbr.rel (%p1264) target = $region88
        $region87: #{vae_forward.1} parent=75 // pred_region
          _
        $region88: #{vae_forward.1} parent=75 // pred_fallthru
          _
      $region76: #{vae_forward.1} parent=5 // pred_fallthru
        _
      %p1267 = scmp.le.s32.totalorder 2, %s23
      // Predicated region
      $region89: #{vae_forward.1} parent=5 // pred_check
        %p1268 = pneg %p1267
      $region90: #{vae_forward.1} parent=5 // pred_check_branch
        %1270 = sbr.rel (%p1268) target = $region92
      $region91: #{vae_forward.1} parent=5 // pred_region
        %s1271 = ssub.s32 %s23, 2
        // Predicated region
        $region93: #{vae_forward.1} parent=91 // pred_check
          %p1272 = pneg %p356
        $region94: #{vae_forward.1} parent=91 // pred_check_branch
          %1274 = sbr.rel (%p1272) target = $region96
        $region95: #{vae_forward.1} parent=91 // pred_region
          %p1275 = scmp.lt.s32.totalorder %s29, 3
          %s1276 = scalar_select %p1275, %s29, 3
          %s1277 = smul.addr %s1276, 8
          %s1278 = scalar_lea.vmem %s14, %s1277
        $region96: #{vae_forward.1} parent=91 // pred_fallthru
          _
        // Predicated region
        $region97: #{vae_forward.1} parent=91 // pred_check
          %p1279 = pneg %p382
        $region98: #{vae_forward.1} parent=91 // pred_check_branch
          %1281 = sbr.rel (%p1279) target = $region100
        $region99: #{vae_forward.1} parent=91 // pred_region
          %p1282 = scmp.lt.s32.totalorder %s29, 3
          %s1283 = scalar_select %p1282, %s29, 3
          %s1284 = smul.addr %s1283, 8
          %s1285 = scalar_lea.vmem %s15, %s1284
        $region100: #{vae_forward.1} parent=91 // pred_fallthru
          _
      $region92: #{vae_forward.1} parent=5 // pred_fallthru
        _
    $region6: #{vae_forward.1} parent=1 // loop_footer
      %s27 = sadd.s32 1, %s23
    $region7: #{vae_forward.1} parent=1 // loop_footer_branch
      %22 = sbr.rel target = $region3
    $region8: #{vae_forward.1} parent=1 // loop_exit
      _
    %1286 = vsyncpa [#allocation3], 1
    %s1287 = scalar_lea.sflag [#allocation3], 1
    %1288 = vsyncpa %s1287, 1

</llo_original>
